<compile_context>
chip_gen: v7x
topology: tpu7x:2x2x1
jax: 0.10.0
libtpu: 0.0.40
codegen_flags: <defaults>
</compile_context>

<pallas_src>
import functools
import math

import jax
import jax.numpy as jnp
from jax.experimental import pallas as pl
from jax.experimental.pallas import tpu as pltpu


# ----------------------------------------------------------------------------- kernel ---


def _conv_bottleneck_kernel(dec_ref, enc_ref, wd_ref, we_ref, b_ref, cmask_ref,
                            o_ref, acc_ref, dpad_ref, epad_ref,
                            *, W, HWp, pad_l):
    """One (batch n, channel-chunk k) grid cell.

    dec_ref:  (1, 1, Cdk, HWp)  f32   decoder-channel chunk, spatial flattened on lanes
    enc_ref:  (1, 1, Cek, HWp)  f32   encoder-channel chunk
    wd_ref:   (1, 9, Cout, Cdk) bf16  per-tap weights for the dec channels
    we_ref:   (1, 9, Cout, Cek) bf16  per-tap weights for the enc channels
    b_ref:    (Cout, 1)         f32   bias
    cmask_ref:(2, HWp)          bf16  column-validity masks (row 0: dc=-1, row 1: dc=+1)
    o_ref:    (1, Cout, HWp)          output tile (lane dense)
    acc_ref:  (Cout, HWp)       f32   accumulator (persists over the k axis)
    dpad_ref: (Cdk, P)          bf16  lane-padded staging buffer (zero halo bands)
    epad_ref: (Cek, P)          bf16  lane-padded staging buffer
    """
    k = pl.program_id(1)

    @pl.when(k == 0)
    def _init():
        acc_ref[...] = jnp.zeros_like(acc_ref)

    # Column masks on the flattened output lanes.  Row validity needs no mask: the zero
    # halo bands of the staging buffer absorb every out-of-image row read.
    m_left = cmask_ref[0:1, :]     # valid when output col >= 1      (tap dc == -1)
    m_right = cmask_ref[1:2, :]    # valid when output col <= W - 2  (tap dc == +1)

    def accumulate(x_ref, pad_ref, w_ref):
        ck, p_total = pad_ref.shape
        # Stage the channel chunk into the lane-padded buffer (bf16), zero bands on
        # both sides.  All three stores use 128-aligned static windows.
        pad_ref[:, :pad_l] = jnp.zeros((ck, pad_l), jnp.bfloat16)
        pad_ref[:, pad_l + HWp:] = jnp.zeros((ck, p_total - pad_l - HWp), jnp.bfloat16)
        pad_ref[:, pad_l:pad_l + HWp] = x_ref[0, 0].astype(jnp.bfloat16)

        # 9 accumulating MXU matmuls, one per 3x3 tap.  Each tap is a *static* lane
        # window of the staged buffer: out[p] needs in[p + dr*W + dc].
        for t in range(9):
            dr, dc = t // 3 - 1, t % 3 - 1
            start = pad_l + dr * W + dc
            xs = pad_ref[:, start:start + HWp]          # (ck, HWp) bf16
            if dc == -1:
                xs = xs * m_left
            elif dc == 1:
                xs = xs * m_right
            acc_ref[...] += jnp.dot(w_ref[0, t], xs,
                                    preferred_element_type=jnp.float32)

    accumulate(dec_ref, dpad_ref, wd_ref)   # dec half of the (virtual) concat
    accumulate(enc_ref, epad_ref, we_ref)   # enc half

    @pl.when(k == pl.num_programs(1) - 1)
    def _epilogue():
        y = acc_ref[...] + b_ref[...]                       # bias, f32
        o_ref[0] = jnp.maximum(y, 0.0).astype(o_ref.dtype)  # ReLU + lane-dense store


# ------------------------------------------------------------------- tiling / VMEM ------


def _ceil_to(x, m):
    return ((x + m - 1) // m) * m


def _vmem_capacity_bytes():
    try:
        return int(pltpu.get_tpu_info().vmem_capacity_bytes)
    except Exception:
        return 64 << 20  # conservative: v7x per-TensorCore VMEM


def _block_footprint_bytes(kt, Cd, Ce, Cout, HWp, P, in_bytes, out_bytes):
    cdk, cek = Cd // kt, Ce // kt
    fp = 0
    fp += 2 * cdk * HWp * in_bytes          # dec block (double buffered)
    fp += 2 * cek * HWp * in_bytes          # enc block (double buffered)
    fp += 2 * 9 * Cout * (cdk + cek) * 2    # per-tap weights, bf16
    fp += 2 * Cout * 128 * 4                # bias (lane padded)
    fp += 2 * 2 * HWp * 2                   # column masks
    fp += 2 * Cout * HWp * out_bytes        # output block
    fp += Cout * HWp * 4                    # f32 accumulator scratch
    fp += (cdk + cek) * P * 2               # bf16 staging scratches
    return fp


def _pick_channel_split(Cd, Ce, Cout, HWp, P, in_bytes, out_bytes, budget):
    """Smallest channel split KT (dividing both Cd and Ce) whose blocks fit `budget`."""
    best = 1
    for kt in range(1, math.gcd(Cd, Ce) + 1):
        if Cd % kt or Ce % kt:
            continue
        best = kt
        if _block_footprint_bytes(kt, Cd, Ce, Cout, HWp, P, in_bytes, out_bytes) <= budget:
            return kt
    return best


# ------------------------------------------------------------------------- wrapper ------


def conv_bottleneck(dec, enc, weight, bias):
    """dec: (N, Cd, H, W), enc: (N, Ce, H, W)  [NCHW, like PyTorch]
    weight: (Cout, Cd+Ce, 3, 3), bias: (Cout,)
    returns: (N, Cout, H, W)  [NCHW]   == ReLU(Conv2d(cat([dec, enc], 1)))
    """
    N, Cd, H, W = dec.shape
    Ce = enc.shape[1]
    Cin = Cd + Ce
    Cout = weight.shape[0]
    assert weight.shape == (Cout, Cin, 3, 3)

    HW = H * W
    HWp = _ceil_to(HW, 128)                 # lane-dense flattened spatial extent
    pad_l = _ceil_to(W + 1, 128)            # halo band (covers max |shift| = W+1), aligned
    P = HWp + 2 * pad_l                     # staging-buffer lane extent
    out_dtype = dec.dtype
    in_bytes = jnp.dtype(dec.dtype).itemsize
    out_bytes = jnp.dtype(out_dtype).itemsize

    # --- activations: free reshape to (N, C, HW); pad lanes only if HW % 128 != 0 -------
    dec_f = dec.reshape(N, Cd, HW)
    enc_f = enc.reshape(N, Ce, HW)
    if HWp != HW:
        dec_f = jnp.pad(dec_f, ((0, 0), (0, 0), (0, HWp - HW)))
        enc_f = jnp.pad(enc_f, ((0, 0), (0, 0), (0, HWp - HW)))

    # --- weights: (Cout, Cin, 3, 3) -> per-tap (9, Cout, C) bf16, split dec / enc -------
    w_taps = jnp.transpose(weight, (2, 3, 0, 1)).reshape(9, Cout, Cin).astype(jnp.bfloat16)
    wd_taps = w_taps[:, :, :Cd]
    we_taps = w_taps[:, :, Cd:]
    b2 = bias.reshape(Cout, 1).astype(jnp.float32)

    # --- column-validity masks on the flattened output positions ------------------------
    col = jnp.arange(HWp, dtype=jnp.int32) % W
    cmask = jnp.stack([col >= 1, col <= W - 2], axis=0).astype(jnp.bfloat16)  # (2, HWp)

    # --- VMEM-aware channel (reduction) split and vmem limit ----------------------------
    cap = _vmem_capacity_bytes()
    KT = _pick_channel_split(Cd, Ce, Cout, HWp, P, in_bytes, out_bytes,
                             budget=int(cap * 0.6))
    Cdk, Cek = Cd // KT, Ce // KT
    footprint = _block_footprint_bytes(KT, Cd, Ce, Cout, HWp, P, in_bytes, out_bytes)
    vmem_limit = int(min(cap, max(32 << 20, int(footprint * 1.5) + (4 << 20))))

    # Pre-split the channel (k) axis as a leading array dim so every block equals the
    # full trailing dims (always a legal (8,128)-compatible BlockSpec).
    dec_r = dec_f.reshape(N, KT, Cdk, HWp)
    enc_r = enc_f.reshape(N, KT, Cek, HWp)
    wd_k = jnp.transpose(wd_taps.reshape(9, Cout, KT, Cdk), (2, 0, 1, 3))  # (KT,9,Cout,Cdk)
    we_k = jnp.transpose(we_taps.reshape(9, Cout, KT, Cek), (2, 0, 1, 3))  # (KT,9,Cout,Cek)

    kernel = functools.partial(_conv_bottleneck_kernel, W=W, HWp=HWp, pad_l=pad_l)

    out = pl.pallas_call(
        kernel,
        out_shape=jax.ShapeDtypeStruct((N, Cout, HWp), out_dtype),
        grid=(N, KT),
        in_specs=[
            pl.BlockSpec((1, 1, Cdk, HWp), lambda n, k: (n, k, 0, 0)),   # dec chunk
            pl.BlockSpec((1, 1, Cek, HWp), lambda n, k: (n, k, 0, 0)),   # enc chunk
            pl.BlockSpec((1, 9, Cout, Cdk), lambda n, k: (k, 0, 0, 0)),  # dec weights
            pl.BlockSpec((1, 9, Cout, Cek), lambda n, k: (k, 0, 0, 0)),  # enc weights
            pl.BlockSpec((Cout, 1), lambda n, k: (0, 0)),                # bias (resident)
            pl.BlockSpec((2, HWp), lambda n, k: (0, 0)),                 # col masks
        ],
        out_specs=pl.BlockSpec((1, Cout, HWp), lambda n, k: (n, 0, 0)),
        scratch_shapes=[
            pltpu.VMEM((Cout, HWp), jnp.float32),    # accumulator
            pltpu.VMEM((Cdk, P), jnp.bfloat16),      # dec staging (halo-padded)
            pltpu.VMEM((Cek, P), jnp.bfloat16),      # enc staging (halo-padded)
        ],
        compiler_params=pltpu.CompilerParams(
            dimension_semantics=("parallel", "arbitrary"),
            vmem_limit_bytes=vmem_limit),
    )(dec_r, enc_r, wd_k, we_k, b2, cmask)

    if HWp != HW:
        out = out[:, :, :HW]
    # (N, Cout, H*W) is already NCHW-flattened: plain reshape, no transpose.
    return out.reshape(N, Cout, H, W)


# ----------------------------------------------------------------------- reference ------


def _reference(dec, enc, weight, bias):
    """Plain-JAX reference mirroring the PyTorch forward (NCHW conv + bias + ReLU).

    Inputs/weights rounded to bf16 (like the kernel's MXU operands), f32 accumulation.
    """
    x = jnp.concatenate([dec, enc], axis=1)
    xq = x.astype(jnp.bfloat16).astype(jnp.float32)
    wq = weight.astype(jnp.bfloat16).astype(jnp.float32)
    y = jax.lax.conv_general_dilated(
        xq, wq, window_strides=(1, 1), padding=((1, 1), (1, 1)),
        dimension_numbers=("NCHW", "OIHW", "NCHW"),
        precision=jax.lax.Precision.HIGHEST)
    y = y + bias.reshape(1, -1, 1, 1)
    return jnp.maximum(y, 0.0)


if __name__ == "__main__":
    key = jax.random.PRNGKey(0)
    k_dec, k_enc, k_w, k_b = jax.random.split(key, 4)

    # Small shapes: batch=2, dec/enc channels=4 each -> in_channels=8, out_channels=8, 16x16.
    N, Cd, Ce, H, W = 2, 4, 4, 16, 16
    Cin, Cout = Cd + Ce, 8

    dec = jax.random.normal(k_dec, (N, Cd, H, W), dtype=jnp.float32)
    enc = jax.random.normal(k_enc, (N, Ce, H, W), dtype=jnp.float32)

    # Deterministic parameter init (PyTorch Conv2d default: U(-b, b), b = 1/sqrt(fan_in)).
    fan_in = Cin * 3 * 3
    bound = 1.0 / (fan_in ** 0.5)
    weight = jax.random.uniform(k_w, (Cout, Cin, 3, 3), jnp.float32, -bound, bound)
    bias = jax.random.uniform(k_b, (Cout,), jnp.float32, -bound, bound)

    out = jax.block_until_ready(conv_bottleneck(dec, enc, weight, bias))

    ref = jax.block_until_ready(_reference(dec, enc, weight, bias))
    assert out.shape == (N, Cout, H, W)
    err = float(jnp.max(jnp.abs(out - ref)))
    assert err < 2e-3, f"mismatch vs reference conv: max abs err = {err}"

    print("KERNEL_OK")
</pallas_src>

<mosaic_0001>
module attributes {stable_mosaic.version = 11 : i64} {
  func.func @_conv_bottleneck_kernel(%arg0: i32, %arg1: i32, %arg2: memref<1x1x4x256xf32, #tpu.memory_space<vmem>>, %arg3: memref<1x1x4x256xf32, #tpu.memory_space<vmem>>, %arg4: memref<1x9x8x4xbf16, #tpu.memory_space<vmem>>, %arg5: memref<1x9x8x4xbf16, #tpu.memory_space<vmem>>, %arg6: memref<8x1xf32, #tpu.memory_space<vmem>>, %arg7: memref<2x256xbf16, #tpu.memory_space<vmem>>, %arg8: memref<1x8x256xf32, #tpu.memory_space<vmem>>, %arg9: memref<8x256xf32, #tpu.memory_space<vmem>>, %arg10: memref<4x512xbf16, #tpu.memory_space<vmem>>, %arg11: memref<4x512xbf16, #tpu.memory_space<vmem>>) attributes {dimension_semantics = [#tpu.dimension_semantics<parallel>, #tpu.dimension_semantics<arbitrary>], iteration_bounds = array<i64: 2, 1>, scalar_prefetch = 0 : i64, scratch_operands = 3 : i64, tpu.core_type = #tpu.core_type<tc>, window_params = [{transform_indices = @transform_0, window_bounds = array<i64: 1, 1, 4, 256>}, {transform_indices = @transform_1, window_bounds = array<i64: 1, 1, 4, 256>}, {transform_indices = @transform_2, window_bounds = array<i64: 1, 9, 8, 4>}, {transform_indices = @transform_3, window_bounds = array<i64: 1, 9, 8, 4>}, {pipeline_mode = #tpu.pipeline_mode<synchronous>, transform_indices = @transform_4, window_bounds = array<i64: 8, 1>}, {pipeline_mode = #tpu.pipeline_mode<synchronous>, transform_indices = @transform_5, window_bounds = array<i64: 2, 256>}, {transform_indices = @transform_6, window_bounds = array<i64: 1, 8, 256>}]} {
    %c0_i32 = arith.constant 0 : i32
    %0 = arith.cmpi eq, %arg1, %c0_i32 : i32
    %1 = arith.extui %0 : i1 to i32
    %c0_i32_0 = arith.constant 0 : i32
    %2 = arith.cmpi ne, %1, %c0_i32_0 : i32
    scf.if %2 {
      %cst_209 = arith.constant 0.000000e+00 : f32
      %174 = vector.broadcast %cst_209 : f32 to vector<8x256xf32>
      %c0_210 = arith.constant 0 : index
      %c0_211 = arith.constant 0 : index
      %175 = vector.load %arg9[%c0_210, %c0_211] : memref<8x256xf32, #tpu.memory_space<vmem>>, vector<8x256xf32>
      tpu.vector_store %arg9[%c0_210, %c0_211], %174 {strides = array<i32>} : memref<8x256xf32, #tpu.memory_space<vmem>>, vector<8x256xf32>,
    } else {
    }
    %c0 = arith.constant 0 : index
    %c0_1 = arith.constant 0 : index
    %3 = vector.load %arg7[%c0, %c0_1] : memref<2x256xbf16, #tpu.memory_space<vmem>>, vector<1x256xbf16>
    %c1 = arith.constant 1 : index
    %c0_2 = arith.constant 0 : index
    %4 = vector.load %arg7[%c1, %c0_2] : memref<2x256xbf16, #tpu.memory_space<vmem>>, vector<1x256xbf16>
    %cst = arith.constant 0.000000e+00 : bf16
    %5 = vector.broadcast %cst : bf16 to vector<4x128xbf16>
    %c0_3 = arith.constant 0 : index
    %c0_4 = arith.constant 0 : index
    %6 = vector.load %arg10[%c0_3, %c0_4] : memref<4x512xbf16, #tpu.memory_space<vmem>>, vector<4x128xbf16>
    tpu.vector_store %arg10[%c0_3, %c0_4], %5 {strides = array<i32>} : memref<4x512xbf16, #tpu.memory_space<vmem>>, vector<4x128xbf16>,
    %cst_5 = arith.constant 0.000000e+00 : bf16
    %7 = vector.broadcast %cst_5 : bf16 to vector<4x128xbf16>
    %c0_6 = arith.constant 0 : index
    %c384 = arith.constant 384 : index
    %8 = vector.load %arg10[%c0_6, %c384] : memref<4x512xbf16, #tpu.memory_space<vmem>>, vector<4x128xbf16>
    tpu.vector_store %arg10[%c0_6, %c384], %7 {strides = array<i32>} : memref<4x512xbf16, #tpu.memory_space<vmem>>, vector<4x128xbf16>,
    %c0_7 = arith.constant 0 : index
    %c0_8 = arith.constant 0 : index
    %c0_9 = arith.constant 0 : index
    %c0_10 = arith.constant 0 : index
    %9 = vector.load %arg2[%c0_7, %c0_8, %c0_9, %c0_10] : memref<1x1x4x256xf32, #tpu.memory_space<vmem>>, vector<1x1x4x256xf32>
    %10 = vector.shape_cast %9 : vector<1x1x4x256xf32> to vector<4x256xf32>
    %11 = arith.truncf %10 : vector<4x256xf32> to vector<4x256xbf16>
    %c0_11 = arith.constant 0 : index
    %c128 = arith.constant 128 : index
    %12 = vector.load %arg10[%c0_11, %c128] : memref<4x512xbf16, #tpu.memory_space<vmem>>, vector<4x256xbf16>
    tpu.vector_store %arg10[%c0_11, %c128], %11 {strides = array<i32>} : memref<4x512xbf16, #tpu.memory_space<vmem>>, vector<4x256xbf16>,
    %c0_12 = arith.constant 0 : index
    %c111 = arith.constant 111 : index
    %13 = vector.load %arg10[%c0_12, %c111] : memref<4x512xbf16, #tpu.memory_space<vmem>>, vector<4x256xbf16>
    %14 = vector.broadcast %3 : vector<1x256xbf16> to vector<4x256xbf16>
    %15 = arith.mulf %13, %14 : vector<4x256xbf16>
    %c0_13 = arith.constant 0 : index
    %c0_14 = arith.constant 0 : index
    %16 = vector.load %arg9[%c0_13, %c0_14] : memref<8x256xf32, #tpu.memory_space<vmem>>, vector<8x256xf32>
    %c0_15 = arith.constant 0 : index
    %c0_16 = arith.constant 0 : index
    %c0_17 = arith.constant 0 : index
    %c0_18 = arith.constant 0 : index
    %17 = vector.load %arg4[%c0_15, %c0_16, %c0_17, %c0_18] : memref<1x9x8x4xbf16, #tpu.memory_space<vmem>>, vector<1x1x8x4xbf16>
    %18 = vector.shape_cast %17 : vector<1x1x8x4xbf16> to vector<8x4xbf16>
    %cst_19 = arith.constant dense<0.000000e+00> : vector<8x256xf32>
    %19 = tpu.matmul %18, %15, %cst_19 {dimension_numbers = #tpu.dot_dimension_numbers<[1], [0], [0], [1], [0, 0, 1, 1], [], []>} : vector<8x4xbf16>, vector<4x256xbf16>, vector<8x256xf32> -> vector<8x256xf32>
    %20 = arith.addf %16, %19 : vector<8x256xf32>
    %c0_20 = arith.constant 0 : index
    %c0_21 = arith.constant 0 : index
    %21 = vector.load %arg9[%c0_20, %c0_21] : memref<8x256xf32, #tpu.memory_space<vmem>>, vector<8x256xf32>
    tpu.vector_store %arg9[%c0_20, %c0_21], %20 {strides = array<i32>} : memref<8x256xf32, #tpu.memory_space<vmem>>, vector<8x256xf32>,
    %c0_22 = arith.constant 0 : index
    %c112 = arith.constant 112 : index
    %22 = vector.load %arg10[%c0_22, %c112] : memref<4x512xbf16, #tpu.memory_space<vmem>>, vector<4x256xbf16>
    %c0_23 = arith.constant 0 : index
    %c0_24 = arith.constant 0 : index
    %23 = vector.load %arg9[%c0_23, %c0_24] : memref<8x256xf32, #tpu.memory_space<vmem>>, vector<8x256xf32>
    %c0_25 = arith.constant 0 : index
    %c1_26 = arith.constant 1 : index
    %c0_27 = arith.constant 0 : index
    %c0_28 = arith.constant 0 : index
    %24 = vector.load %arg4[%c0_25, %c1_26, %c0_27, %c0_28] : memref<1x9x8x4xbf16, #tpu.memory_space<vmem>>, vector<1x1x8x4xbf16>
    %25 = vector.shape_cast %24 : vector<1x1x8x4xbf16> to vector<8x4xbf16>
    %cst_29 = arith.constant dense<0.000000e+00> : vector<8x256xf32>
    %26 = tpu.matmul %25, %22, %cst_29 {dimension_numbers = #tpu.dot_dimension_numbers<[1], [0], [0], [1], [0, 0, 1, 1], [], []>} : vector<8x4xbf16>, vector<4x256xbf16>, vector<8x256xf32> -> vector<8x256xf32>
    %27 = arith.addf %23, %26 : vector<8x256xf32>
    %c0_30 = arith.constant 0 : index
    %c0_31 = arith.constant 0 : index
    %28 = vector.load %arg9[%c0_30, %c0_31] : memref<8x256xf32, #tpu.memory_space<vmem>>, vector<8x256xf32>
    tpu.vector_store %arg9[%c0_30, %c0_31], %27 {strides = array<i32>} : memref<8x256xf32, #tpu.memory_space<vmem>>, vector<8x256xf32>,
    %c0_32 = arith.constant 0 : index
    %c113 = arith.constant 113 : index
    %29 = vector.load %arg10[%c0_32, %c113] : memref<4x512xbf16, #tpu.memory_space<vmem>>, vector<4x256xbf16>
    %30 = vector.broadcast %4 : vector<1x256xbf16> to vector<4x256xbf16>
    %31 = arith.mulf %29, %30 : vector<4x256xbf16>
    %c0_33 = arith.constant 0 : index
    %c0_34 = arith.constant 0 : index
    %32 = vector.load %arg9[%c0_33, %c0_34] : memref<8x256xf32, #tpu.memory_space<vmem>>, vector<8x256xf32>
    %c0_35 = arith.constant 0 : index
    %c2 = arith.constant 2 : index
    %c0_36 = arith.constant 0 : index
    %c0_37 = arith.constant 0 : index
    %33 = vector.load %arg4[%c0_35, %c2, %c0_36, %c0_37] : memref<1x9x8x4xbf16, #tpu.memory_space<vmem>>, vector<1x1x8x4xbf16>
    %34 = vector.shape_cast %33 : vector<1x1x8x4xbf16> to vector<8x4xbf16>
    %cst_38 = arith.constant dense<0.000000e+00> : vector<8x256xf32>
    %35 = tpu.matmul %34, %31, %cst_38 {dimension_numbers = #tpu.dot_dimension_numbers<[1], [0], [0], [1], [0, 0, 1, 1], [], []>} : vector<8x4xbf16>, vector<4x256xbf16>, vector<8x256xf32> -> vector<8x256xf32>
    %36 = arith.addf %32, %35 : vector<8x256xf32>
    %c0_39 = arith.constant 0 : index
    %c0_40 = arith.constant 0 : index
    %37 = vector.load %arg9[%c0_39, %c0_40] : memref<8x256xf32, #tpu.memory_space<vmem>>, vector<8x256xf32>
    tpu.vector_store %arg9[%c0_39, %c0_40], %36 {strides = array<i32>} : memref<8x256xf32, #tpu.memory_space<vmem>>, vector<8x256xf32>,
    %c0_41 = arith.constant 0 : index
    %c127 = arith.constant 127 : index
    %38 = vector.load %arg10[%c0_41, %c127] : memref<4x512xbf16, #tpu.memory_space<vmem>>, vector<4x256xbf16>
    %39 = vector.broadcast %3 : vector<1x256xbf16> to vector<4x256xbf16>
    %40 = arith.mulf %38, %39 : vector<4x256xbf16>
    %c0_42 = arith.constant 0 : index
    %c0_43 = arith.constant 0 : index
    %41 = vector.load %arg9[%c0_42, %c0_43] : memref<8x256xf32, #tpu.memory_space<vmem>>, vector<8x256xf32>
    %c0_44 = arith.constant 0 : index
    %c3 = arith.constant 3 : index
    %c0_45 = arith.constant 0 : index
    %c0_46 = arith.constant 0 : index
    %42 = vector.load %arg4[%c0_44, %c3, %c0_45, %c0_46] : memref<1x9x8x4xbf16, #tpu.memory_space<vmem>>, vector<1x1x8x4xbf16>
    %43 = vector.shape_cast %42 : vector<1x1x8x4xbf16> to vector<8x4xbf16>
    %cst_47 = arith.constant dense<0.000000e+00> : vector<8x256xf32>
    %44 = tpu.matmul %43, %40, %cst_47 {dimension_numbers = #tpu.dot_dimension_numbers<[1], [0], [0], [1], [0, 0, 1, 1], [], []>} : vector<8x4xbf16>, vector<4x256xbf16>, vector<8x256xf32> -> vector<8x256xf32>
    %45 = arith.addf %41, %44 : vector<8x256xf32>
    %c0_48 = arith.constant 0 : index
    %c0_49 = arith.constant 0 : index
    %46 = vector.load %arg9[%c0_48, %c0_49] : memref<8x256xf32, #tpu.memory_space<vmem>>, vector<8x256xf32>
    tpu.vector_store %arg9[%c0_48, %c0_49], %45 {strides = array<i32>} : memref<8x256xf32, #tpu.memory_space<vmem>>, vector<8x256xf32>,
    %c0_50 = arith.constant 0 : index
    %c128_51 = arith.constant 128 : index
    %47 = vector.load %arg10[%c0_50, %c128_51] : memref<4x512xbf16, #tpu.memory_space<vmem>>, vector<4x256xbf16>
    %c0_52 = arith.constant 0 : index
    %c0_53 = arith.constant 0 : index
    %48 = vector.load %arg9[%c0_52, %c0_53] : memref<8x256xf32, #tpu.memory_space<vmem>>, vector<8x256xf32>
    %c0_54 = arith.constant 0 : index
    %c4 = arith.constant 4 : index
    %c0_55 = arith.constant 0 : index
    %c0_56 = arith.constant 0 : index
    %49 = vector.load %arg4[%c0_54, %c4, %c0_55, %c0_56] : memref<1x9x8x4xbf16, #tpu.memory_space<vmem>>, vector<1x1x8x4xbf16>
    %50 = vector.shape_cast %49 : vector<1x1x8x4xbf16> to vector<8x4xbf16>
    %cst_57 = arith.constant dense<0.000000e+00> : vector<8x256xf32>
    %51 = tpu.matmul %50, %47, %cst_57 {dimension_numbers = #tpu.dot_dimension_numbers<[1], [0], [0], [1], [0, 0, 1, 1], [], []>} : vector<8x4xbf16>, vector<4x256xbf16>, vector<8x256xf32> -> vector<8x256xf32>
    %52 = arith.addf %48, %51 : vector<8x256xf32>
    %c0_58 = arith.constant 0 : index
    %c0_59 = arith.constant 0 : index
    %53 = vector.load %arg9[%c0_58, %c0_59] : memref<8x256xf32, #tpu.memory_space<vmem>>, vector<8x256xf32>
    tpu.vector_store %arg9[%c0_58, %c0_59], %52 {strides = array<i32>} : memref<8x256xf32, #tpu.memory_space<vmem>>, vector<8x256xf32>,
    %c0_60 = arith.constant 0 : index
    %c129 = arith.constant 129 : index
    %54 = vector.load %arg10[%c0_60, %c129] : memref<4x512xbf16, #tpu.memory_space<vmem>>, vector<4x256xbf16>
    %55 = vector.broadcast %4 : vector<1x256xbf16> to vector<4x256xbf16>
    %56 = arith.mulf %54, %55 : vector<4x256xbf16>
    %c0_61 = arith.constant 0 : index
    %c0_62 = arith.constant 0 : index
    %57 = vector.load %arg9[%c0_61, %c0_62] : memref<8x256xf32, #tpu.memory_space<vmem>>, vector<8x256xf32>
    %c0_63 = arith.constant 0 : index
    %c5 = arith.constant 5 : index
    %c0_64 = arith.constant 0 : index
    %c0_65 = arith.constant 0 : index
    %58 = vector.load %arg4[%c0_63, %c5, %c0_64, %c0_65] : memref<1x9x8x4xbf16, #tpu.memory_space<vmem>>, vector<1x1x8x4xbf16>
    %59 = vector.shape_cast %58 : vector<1x1x8x4xbf16> to vector<8x4xbf16>
    %cst_66 = arith.constant dense<0.000000e+00> : vector<8x256xf32>
    %60 = tpu.matmul %59, %56, %cst_66 {dimension_numbers = #tpu.dot_dimension_numbers<[1], [0], [0], [1], [0, 0, 1, 1], [], []>} : vector<8x4xbf16>, vector<4x256xbf16>, vector<8x256xf32> -> vector<8x256xf32>
    %61 = arith.addf %57, %60 : vector<8x256xf32>
    %c0_67 = arith.constant 0 : index
    %c0_68 = arith.constant 0 : index
    %62 = vector.load %arg9[%c0_67, %c0_68] : memref<8x256xf32, #tpu.memory_space<vmem>>, vector<8x256xf32>
    tpu.vector_store %arg9[%c0_67, %c0_68], %61 {strides = array<i32>} : memref<8x256xf32, #tpu.memory_space<vmem>>, vector<8x256xf32>,
    %c0_69 = arith.constant 0 : index
    %c143 = arith.constant 143 : index
    %63 = vector.load %arg10[%c0_69, %c143] : memref<4x512xbf16, #tpu.memory_space<vmem>>, vector<4x256xbf16>
    %64 = vector.broadcast %3 : vector<1x256xbf16> to vector<4x256xbf16>
    %65 = arith.mulf %63, %64 : vector<4x256xbf16>
    %c0_70 = arith.constant 0 : index
    %c0_71 = arith.constant 0 : index
    %66 = vector.load %arg9[%c0_70, %c0_71] : memref<8x256xf32, #tpu.memory_space<vmem>>, vector<8x256xf32>
    %c0_72 = arith.constant 0 : index
    %c6 = arith.constant 6 : index
    %c0_73 = arith.constant 0 : index
    %c0_74 = arith.constant 0 : index
    %67 = vector.load %arg4[%c0_72, %c6, %c0_73, %c0_74] : memref<1x9x8x4xbf16, #tpu.memory_space<vmem>>, vector<1x1x8x4xbf16>
    %68 = vector.shape_cast %67 : vector<1x1x8x4xbf16> to vector<8x4xbf16>
    %cst_75 = arith.constant dense<0.000000e+00> : vector<8x256xf32>
    %69 = tpu.matmul %68, %65, %cst_75 {dimension_numbers = #tpu.dot_dimension_numbers<[1], [0], [0], [1], [0, 0, 1, 1], [], []>} : vector<8x4xbf16>, vector<4x256xbf16>, vector<8x256xf32> -> vector<8x256xf32>
    %70 = arith.addf %66, %69 : vector<8x256xf32>
    %c0_76 = arith.constant 0 : index
    %c0_77 = arith.constant 0 : index
    %71 = vector.load %arg9[%c0_76, %c0_77] : memref<8x256xf32, #tpu.memory_space<vmem>>, vector<8x256xf32>
    tpu.vector_store %arg9[%c0_76, %c0_77], %70 {strides = array<i32>} : memref<8x256xf32, #tpu.memory_space<vmem>>, vector<8x256xf32>,
    %c0_78 = arith.constant 0 : index
    %c144 = arith.constant 144 : index
    %72 = vector.load %arg10[%c0_78, %c144] : memref<4x512xbf16, #tpu.memory_space<vmem>>, vector<4x256xbf16>
    %c0_79 = arith.constant 0 : index
    %c0_80 = arith.constant 0 : index
    %73 = vector.load %arg9[%c0_79, %c0_80] : memref<8x256xf32, #tpu.memory_space<vmem>>, vector<8x256xf32>
    %c0_81 = arith.constant 0 : index
    %c7 = arith.constant 7 : index
    %c0_82 = arith.constant 0 : index
    %c0_83 = arith.constant 0 : index
    %74 = vector.load %arg4[%c0_81, %c7, %c0_82, %c0_83] : memref<1x9x8x4xbf16, #tpu.memory_space<vmem>>, vector<1x1x8x4xbf16>
    %75 = vector.shape_cast %74 : vector<1x1x8x4xbf16> to vector<8x4xbf16>
    %cst_84 = arith.constant dense<0.000000e+00> : vector<8x256xf32>
    %76 = tpu.matmul %75, %72, %cst_84 {dimension_numbers = #tpu.dot_dimension_numbers<[1], [0], [0], [1], [0, 0, 1, 1], [], []>} : vector<8x4xbf16>, vector<4x256xbf16>, vector<8x256xf32> -> vector<8x256xf32>
    %77 = arith.addf %73, %76 : vector<8x256xf32>
    %c0_85 = arith.constant 0 : index
    %c0_86 = arith.constant 0 : index
    %78 = vector.load %arg9[%c0_85, %c0_86] : memref<8x256xf32, #tpu.memory_space<vmem>>, vector<8x256xf32>
    tpu.vector_store %arg9[%c0_85, %c0_86], %77 {strides = array<i32>} : memref<8x256xf32, #tpu.memory_space<vmem>>, vector<8x256xf32>,
    %c0_87 = arith.constant 0 : index
    %c145 = arith.constant 145 : index
    %79 = vector.load %arg10[%c0_87, %c145] : memref<4x512xbf16, #tpu.memory_space<vmem>>, vector<4x256xbf16>
    %80 = vector.broadcast %4 : vector<1x256xbf16> to vector<4x256xbf16>
    %81 = arith.mulf %79, %80 : vector<4x256xbf16>
    %c0_88 = arith.constant 0 : index
    %c0_89 = arith.constant 0 : index
    %82 = vector.load %arg9[%c0_88, %c0_89] : memref<8x256xf32, #tpu.memory_space<vmem>>, vector<8x256xf32>
    %c0_90 = arith.constant 0 : index
    %c8 = arith.constant 8 : index
    %c0_91 = arith.constant 0 : index
    %c0_92 = arith.constant 0 : index
    %83 = vector.load %arg4[%c0_90, %c8, %c0_91, %c0_92] : memref<1x9x8x4xbf16, #tpu.memory_space<vmem>>, vector<1x1x8x4xbf16>
    %84 = vector.shape_cast %83 : vector<1x1x8x4xbf16> to vector<8x4xbf16>
    %cst_93 = arith.constant dense<0.000000e+00> : vector<8x256xf32>
    %85 = tpu.matmul %84, %81, %cst_93 {dimension_numbers = #tpu.dot_dimension_numbers<[1], [0], [0], [1], [0, 0, 1, 1], [], []>} : vector<8x4xbf16>, vector<4x256xbf16>, vector<8x256xf32> -> vector<8x256xf32>
    %86 = arith.addf %82, %85 : vector<8x256xf32>
    %c0_94 = arith.constant 0 : index
    %c0_95 = arith.constant 0 : index
    %87 = vector.load %arg9[%c0_94, %c0_95] : memref<8x256xf32, #tpu.memory_space<vmem>>, vector<8x256xf32>
    tpu.vector_store %arg9[%c0_94, %c0_95], %86 {strides = array<i32>} : memref<8x256xf32, #tpu.memory_space<vmem>>, vector<8x256xf32>,
    %cst_96 = arith.constant 0.000000e+00 : bf16
    %88 = vector.broadcast %cst_96 : bf16 to vector<4x128xbf16>
    %c0_97 = arith.constant 0 : index
    %c0_98 = arith.constant 0 : index
    %89 = vector.load %arg11[%c0_97, %c0_98] : memref<4x512xbf16, #tpu.memory_space<vmem>>, vector<4x128xbf16>
    tpu.vector_store %arg11[%c0_97, %c0_98], %88 {strides = array<i32>} : memref<4x512xbf16, #tpu.memory_space<vmem>>, vector<4x128xbf16>,
    %cst_99 = arith.constant 0.000000e+00 : bf16
    %90 = vector.broadcast %cst_99 : bf16 to vector<4x128xbf16>
    %c0_100 = arith.constant 0 : index
    %c384_101 = arith.constant 384 : index
    %91 = vector.load %arg11[%c0_100, %c384_101] : memref<4x512xbf16, #tpu.memory_space<vmem>>, vector<4x128xbf16>
    tpu.vector_store %arg11[%c0_100, %c384_101], %90 {strides = array<i32>} : memref<4x512xbf16, #tpu.memory_space<vmem>>, vector<4x128xbf16>,
    %c0_102 = arith.constant 0 : index
    %c0_103 = arith.constant 0 : index
    %c0_104 = arith.constant 0 : index
    %c0_105 = arith.constant 0 : index
    %92 = vector.load %arg3[%c0_102, %c0_103, %c0_104, %c0_105] : memref<1x1x4x256xf32, #tpu.memory_space<vmem>>, vector<1x1x4x256xf32>
    %93 = vector.shape_cast %92 : vector<1x1x4x256xf32> to vector<4x256xf32>
    %94 = arith.truncf %93 : vector<4x256xf32> to vector<4x256xbf16>
    %c0_106 = arith.constant 0 : index
    %c128_107 = arith.constant 128 : index
    %95 = vector.load %arg11[%c0_106, %c128_107] : memref<4x512xbf16, #tpu.memory_space<vmem>>, vector<4x256xbf16>
    tpu.vector_store %arg11[%c0_106, %c128_107], %94 {strides = array<i32>} : memref<4x512xbf16, #tpu.memory_space<vmem>>, vector<4x256xbf16>,
    %c0_108 = arith.constant 0 : index
    %c111_109 = arith.constant 111 : index
    %96 = vector.load %arg11[%c0_108, %c111_109] : memref<4x512xbf16, #tpu.memory_space<vmem>>, vector<4x256xbf16>
    %97 = vector.broadcast %3 : vector<1x256xbf16> to vector<4x256xbf16>
    %98 = arith.mulf %96, %97 : vector<4x256xbf16>
    %c0_110 = arith.constant 0 : index
    %c0_111 = arith.constant 0 : index
    %99 = vector.load %arg9[%c0_110, %c0_111] : memref<8x256xf32, #tpu.memory_space<vmem>>, vector<8x256xf32>
    %c0_112 = arith.constant 0 : index
    %c0_113 = arith.constant 0 : index
    %c0_114 = arith.constant 0 : index
    %c0_115 = arith.constant 0 : index
    %100 = vector.load %arg5[%c0_112, %c0_113, %c0_114, %c0_115] : memref<1x9x8x4xbf16, #tpu.memory_space<vmem>>, vector<1x1x8x4xbf16>
    %101 = vector.shape_cast %100 : vector<1x1x8x4xbf16> to vector<8x4xbf16>
    %cst_116 = arith.constant dense<0.000000e+00> : vector<8x256xf32>
    %102 = tpu.matmul %101, %98, %cst_116 {dimension_numbers = #tpu.dot_dimension_numbers<[1], [0], [0], [1], [0, 0, 1, 1], [], []>} : vector<8x4xbf16>, vector<4x256xbf16>, vector<8x256xf32> -> vector<8x256xf32>
    %103 = arith.addf %99, %102 : vector<8x256xf32>
    %c0_117 = arith.constant 0 : index
    %c0_118 = arith.constant 0 : index
    %104 = vector.load %arg9[%c0_117, %c0_118] : memref<8x256xf32, #tpu.memory_space<vmem>>, vector<8x256xf32>
    tpu.vector_store %arg9[%c0_117, %c0_118], %103 {strides = array<i32>} : memref<8x256xf32, #tpu.memory_space<vmem>>, vector<8x256xf32>,
    %c0_119 = arith.constant 0 : index
    %c112_120 = arith.constant 112 : index
    %105 = vector.load %arg11[%c0_119, %c112_120] : memref<4x512xbf16, #tpu.memory_space<vmem>>, vector<4x256xbf16>
    %c0_121 = arith.constant 0 : index
    %c0_122 = arith.constant 0 : index
    %106 = vector.load %arg9[%c0_121, %c0_122] : memref<8x256xf32, #tpu.memory_space<vmem>>, vector<8x256xf32>
    %c0_123 = arith.constant 0 : index
    %c1_124 = arith.constant 1 : index
    %c0_125 = arith.constant 0 : index
    %c0_126 = arith.constant 0 : index
    %107 = vector.load %arg5[%c0_123, %c1_124, %c0_125, %c0_126] : memref<1x9x8x4xbf16, #tpu.memory_space<vmem>>, vector<1x1x8x4xbf16>
    %108 = vector.shape_cast %107 : vector<1x1x8x4xbf16> to vector<8x4xbf16>
    %cst_127 = arith.constant dense<0.000000e+00> : vector<8x256xf32>
    %109 = tpu.matmul %108, %105, %cst_127 {dimension_numbers = #tpu.dot_dimension_numbers<[1], [0], [0], [1], [0, 0, 1, 1], [], []>} : vector<8x4xbf16>, vector<4x256xbf16>, vector<8x256xf32> -> vector<8x256xf32>
    %110 = arith.addf %106, %109 : vector<8x256xf32>
    %c0_128 = arith.constant 0 : index
    %c0_129 = arith.constant 0 : index
    %111 = vector.load %arg9[%c0_128, %c0_129] : memref<8x256xf32, #tpu.memory_space<vmem>>, vector<8x256xf32>
    tpu.vector_store %arg9[%c0_128, %c0_129], %110 {strides = array<i32>} : memref<8x256xf32, #tpu.memory_space<vmem>>, vector<8x256xf32>,
    %c0_130 = arith.constant 0 : index
    %c113_131 = arith.constant 113 : index
    %112 = vector.load %arg11[%c0_130, %c113_131] : memref<4x512xbf16, #tpu.memory_space<vmem>>, vector<4x256xbf16>
    %113 = vector.broadcast %4 : vector<1x256xbf16> to vector<4x256xbf16>
    %114 = arith.mulf %112, %113 : vector<4x256xbf16>
    %c0_132 = arith.constant 0 : index
    %c0_133 = arith.constant 0 : index
    %115 = vector.load %arg9[%c0_132, %c0_133] : memref<8x256xf32, #tpu.memory_space<vmem>>, vector<8x256xf32>
    %c0_134 = arith.constant 0 : index
    %c2_135 = arith.constant 2 : index
    %c0_136 = arith.constant 0 : index
    %c0_137 = arith.constant 0 : index
    %116 = vector.load %arg5[%c0_134, %c2_135, %c0_136, %c0_137] : memref<1x9x8x4xbf16, #tpu.memory_space<vmem>>, vector<1x1x8x4xbf16>
    %117 = vector.shape_cast %116 : vector<1x1x8x4xbf16> to vector<8x4xbf16>
    %cst_138 = arith.constant dense<0.000000e+00> : vector<8x256xf32>
    %118 = tpu.matmul %117, %114, %cst_138 {dimension_numbers = #tpu.dot_dimension_numbers<[1], [0], [0], [1], [0, 0, 1, 1], [], []>} : vector<8x4xbf16>, vector<4x256xbf16>, vector<8x256xf32> -> vector<8x256xf32>
    %119 = arith.addf %115, %118 : vector<8x256xf32>
    %c0_139 = arith.constant 0 : index
    %c0_140 = arith.constant 0 : index
    %120 = vector.load %arg9[%c0_139, %c0_140] : memref<8x256xf32, #tpu.memory_space<vmem>>, vector<8x256xf32>
    tpu.vector_store %arg9[%c0_139, %c0_140], %119 {strides = array<i32>} : memref<8x256xf32, #tpu.memory_space<vmem>>, vector<8x256xf32>,
    %c0_141 = arith.constant 0 : index
    %c127_142 = arith.constant 127 : index
    %121 = vector.load %arg11[%c0_141, %c127_142] : memref<4x512xbf16, #tpu.memory_space<vmem>>, vector<4x256xbf16>
    %122 = vector.broadcast %3 : vector<1x256xbf16> to vector<4x256xbf16>
    %123 = arith.mulf %121, %122 : vector<4x256xbf16>
    %c0_143 = arith.constant 0 : index
    %c0_144 = arith.constant 0 : index
    %124 = vector.load %arg9[%c0_143, %c0_144] : memref<8x256xf32, #tpu.memory_space<vmem>>, vector<8x256xf32>
    %c0_145 = arith.constant 0 : index
    %c3_146 = arith.constant 3 : index
    %c0_147 = arith.constant 0 : index
    %c0_148 = arith.constant 0 : index
    %125 = vector.load %arg5[%c0_145, %c3_146, %c0_147, %c0_148] : memref<1x9x8x4xbf16, #tpu.memory_space<vmem>>, vector<1x1x8x4xbf16>
    %126 = vector.shape_cast %125 : vector<1x1x8x4xbf16> to vector<8x4xbf16>
    %cst_149 = arith.constant dense<0.000000e+00> : vector<8x256xf32>
    %127 = tpu.matmul %126, %123, %cst_149 {dimension_numbers = #tpu.dot_dimension_numbers<[1], [0], [0], [1], [0, 0, 1, 1], [], []>} : vector<8x4xbf16>, vector<4x256xbf16>, vector<8x256xf32> -> vector<8x256xf32>
    %128 = arith.addf %124, %127 : vector<8x256xf32>
    %c0_150 = arith.constant 0 : index
    %c0_151 = arith.constant 0 : index
    %129 = vector.load %arg9[%c0_150, %c0_151] : memref<8x256xf32, #tpu.memory_space<vmem>>, vector<8x256xf32>
    tpu.vector_store %arg9[%c0_150, %c0_151], %128 {strides = array<i32>} : memref<8x256xf32, #tpu.memory_space<vmem>>, vector<8x256xf32>,
    %c0_152 = arith.constant 0 : index
    %c128_153 = arith.constant 128 : index
    %130 = vector.load %arg11[%c0_152, %c128_153] : memref<4x512xbf16, #tpu.memory_space<vmem>>, vector<4x256xbf16>
    %c0_154 = arith.constant 0 : index
    %c0_155 = arith.constant 0 : index
    %131 = vector.load %arg9[%c0_154, %c0_155] : memref<8x256xf32, #tpu.memory_space<vmem>>, vector<8x256xf32>
    %c0_156 = arith.constant 0 : index
    %c4_157 = arith.constant 4 : index
    %c0_158 = arith.constant 0 : index
    %c0_159 = arith.constant 0 : index
    %132 = vector.load %arg5[%c0_156, %c4_157, %c0_158, %c0_159] : memref<1x9x8x4xbf16, #tpu.memory_space<vmem>>, vector<1x1x8x4xbf16>
    %133 = vector.shape_cast %132 : vector<1x1x8x4xbf16> to vector<8x4xbf16>
    %cst_160 = arith.constant dense<0.000000e+00> : vector<8x256xf32>
    %134 = tpu.matmul %133, %130, %cst_160 {dimension_numbers = #tpu.dot_dimension_numbers<[1], [0], [0], [1], [0, 0, 1, 1], [], []>} : vector<8x4xbf16>, vector<4x256xbf16>, vector<8x256xf32> -> vector<8x256xf32>
    %135 = arith.addf %131, %134 : vector<8x256xf32>
    %c0_161 = arith.constant 0 : index
    %c0_162 = arith.constant 0 : index
    %136 = vector.load %arg9[%c0_161, %c0_162] : memref<8x256xf32, #tpu.memory_space<vmem>>, vector<8x256xf32>
    tpu.vector_store %arg9[%c0_161, %c0_162], %135 {strides = array<i32>} : memref<8x256xf32, #tpu.memory_space<vmem>>, vector<8x256xf32>,
    %c0_163 = arith.constant 0 : index
    %c129_164 = arith.constant 129 : index
    %137 = vector.load %arg11[%c0_163, %c129_164] : memref<4x512xbf16, #tpu.memory_space<vmem>>, vector<4x256xbf16>
    %138 = vector.broadcast %4 : vector<1x256xbf16> to vector<4x256xbf16>
    %139 = arith.mulf %137, %138 : vector<4x256xbf16>
    %c0_165 = arith.constant 0 : index
    %c0_166 = arith.constant 0 : index
    %140 = vector.load %arg9[%c0_165, %c0_166] : memref<8x256xf32, #tpu.memory_space<vmem>>, vector<8x256xf32>
    %c0_167 = arith.constant 0 : index
    %c5_168 = arith.constant 5 : index
    %c0_169 = arith.constant 0 : index
    %c0_170 = arith.constant 0 : index
    %141 = vector.load %arg5[%c0_167, %c5_168, %c0_169, %c0_170] : memref<1x9x8x4xbf16, #tpu.memory_space<vmem>>, vector<1x1x8x4xbf16>
    %142 = vector.shape_cast %141 : vector<1x1x8x4xbf16> to vector<8x4xbf16>
    %cst_171 = arith.constant dense<0.000000e+00> : vector<8x256xf32>
    %143 = tpu.matmul %142, %139, %cst_171 {dimension_numbers = #tpu.dot_dimension_numbers<[1], [0], [0], [1], [0, 0, 1, 1], [], []>} : vector<8x4xbf16>, vector<4x256xbf16>, vector<8x256xf32> -> vector<8x256xf32>
    %144 = arith.addf %140, %143 : vector<8x256xf32>
    %c0_172 = arith.constant 0 : index
    %c0_173 = arith.constant 0 : index
    %145 = vector.load %arg9[%c0_172, %c0_173] : memref<8x256xf32, #tpu.memory_space<vmem>>, vector<8x256xf32>
    tpu.vector_store %arg9[%c0_172, %c0_173], %144 {strides = array<i32>} : memref<8x256xf32, #tpu.memory_space<vmem>>, vector<8x256xf32>,
    %c0_174 = arith.constant 0 : index
    %c143_175 = arith.constant 143 : index
    %146 = vector.load %arg11[%c0_174, %c143_175] : memref<4x512xbf16, #tpu.memory_space<vmem>>, vector<4x256xbf16>
    %147 = vector.broadcast %3 : vector<1x256xbf16> to vector<4x256xbf16>
    %148 = arith.mulf %146, %147 : vector<4x256xbf16>
    %c0_176 = arith.constant 0 : index
    %c0_177 = arith.constant 0 : index
    %149 = vector.load %arg9[%c0_176, %c0_177] : memref<8x256xf32, #tpu.memory_space<vmem>>, vector<8x256xf32>
    %c0_178 = arith.constant 0 : index
    %c6_179 = arith.constant 6 : index
    %c0_180 = arith.constant 0 : index
    %c0_181 = arith.constant 0 : index
    %150 = vector.load %arg5[%c0_178, %c6_179, %c0_180, %c0_181] : memref<1x9x8x4xbf16, #tpu.memory_space<vmem>>, vector<1x1x8x4xbf16>
    %151 = vector.shape_cast %150 : vector<1x1x8x4xbf16> to vector<8x4xbf16>
    %cst_182 = arith.constant dense<0.000000e+00> : vector<8x256xf32>
    %152 = tpu.matmul %151, %148, %cst_182 {dimension_numbers = #tpu.dot_dimension_numbers<[1], [0], [0], [1], [0, 0, 1, 1], [], []>} : vector<8x4xbf16>, vector<4x256xbf16>, vector<8x256xf32> -> vector<8x256xf32>
    %153 = arith.addf %149, %152 : vector<8x256xf32>
    %c0_183 = arith.constant 0 : index
    %c0_184 = arith.constant 0 : index
    %154 = vector.load %arg9[%c0_183, %c0_184] : memref<8x256xf32, #tpu.memory_space<vmem>>, vector<8x256xf32>
    tpu.vector_store %arg9[%c0_183, %c0_184], %153 {strides = array<i32>} : memref<8x256xf32, #tpu.memory_space<vmem>>, vector<8x256xf32>,
    %c0_185 = arith.constant 0 : index
    %c144_186 = arith.constant 144 : index
    %155 = vector.load %arg11[%c0_185, %c144_186] : memref<4x512xbf16, #tpu.memory_space<vmem>>, vector<4x256xbf16>
    %c0_187 = arith.constant 0 : index
    %c0_188 = arith.constant 0 : index
    %156 = vector.load %arg9[%c0_187, %c0_188] : memref<8x256xf32, #tpu.memory_space<vmem>>, vector<8x256xf32>
    %c0_189 = arith.constant 0 : index
    %c7_190 = arith.constant 7 : index
    %c0_191 = arith.constant 0 : index
    %c0_192 = arith.constant 0 : index
    %157 = vector.load %arg5[%c0_189, %c7_190, %c0_191, %c0_192] : memref<1x9x8x4xbf16, #tpu.memory_space<vmem>>, vector<1x1x8x4xbf16>
    %158 = vector.shape_cast %157 : vector<1x1x8x4xbf16> to vector<8x4xbf16>
    %cst_193 = arith.constant dense<0.000000e+00> : vector<8x256xf32>
    %159 = tpu.matmul %158, %155, %cst_193 {dimension_numbers = #tpu.dot_dimension_numbers<[1], [0], [0], [1], [0, 0, 1, 1], [], []>} : vector<8x4xbf16>, vector<4x256xbf16>, vector<8x256xf32> -> vector<8x256xf32>
    %160 = arith.addf %156, %159 : vector<8x256xf32>
    %c0_194 = arith.constant 0 : index
    %c0_195 = arith.constant 0 : index
    %161 = vector.load %arg9[%c0_194, %c0_195] : memref<8x256xf32, #tpu.memory_space<vmem>>, vector<8x256xf32>
    tpu.vector_store %arg9[%c0_194, %c0_195], %160 {strides = array<i32>} : memref<8x256xf32, #tpu.memory_space<vmem>>, vector<8x256xf32>,
    %c0_196 = arith.constant 0 : index
    %c145_197 = arith.constant 145 : index
    %162 = vector.load %arg11[%c0_196, %c145_197] : memref<4x512xbf16, #tpu.memory_space<vmem>>, vector<4x256xbf16>
    %163 = vector.broadcast %4 : vector<1x256xbf16> to vector<4x256xbf16>
    %164 = arith.mulf %162, %163 : vector<4x256xbf16>
    %c0_198 = arith.constant 0 : index
    %c0_199 = arith.constant 0 : index
    %165 = vector.load %arg9[%c0_198, %c0_199] : memref<8x256xf32, #tpu.memory_space<vmem>>, vector<8x256xf32>
    %c0_200 = arith.constant 0 : index
    %c8_201 = arith.constant 8 : index
    %c0_202 = arith.constant 0 : index
    %c0_203 = arith.constant 0 : index
    %166 = vector.load %arg5[%c0_200, %c8_201, %c0_202, %c0_203] : memref<1x9x8x4xbf16, #tpu.memory_space<vmem>>, vector<1x1x8x4xbf16>
    %167 = vector.shape_cast %166 : vector<1x1x8x4xbf16> to vector<8x4xbf16>
    %cst_204 = arith.constant dense<0.000000e+00> : vector<8x256xf32>
    %168 = tpu.matmul %167, %164, %cst_204 {dimension_numbers = #tpu.dot_dimension_numbers<[1], [0], [0], [1], [0, 0, 1, 1], [], []>} : vector<8x4xbf16>, vector<4x256xbf16>, vector<8x256xf32> -> vector<8x256xf32>
    %169 = arith.addf %165, %168 : vector<8x256xf32>
    %c0_205 = arith.constant 0 : index
    %c0_206 = arith.constant 0 : index
    %170 = vector.load %arg9[%c0_205, %c0_206] : memref<8x256xf32, #tpu.memory_space<vmem>>, vector<8x256xf32>
    tpu.vector_store %arg9[%c0_205, %c0_206], %169 {strides = array<i32>} : memref<8x256xf32, #tpu.memory_space<vmem>>, vector<8x256xf32>,
    %c0_i32_207 = arith.constant 0 : i32
    %171 = arith.cmpi eq, %arg1, %c0_i32_207 : i32
    %172 = arith.extui %171 : i1 to i32
    %c0_i32_208 = arith.constant 0 : i32
    %173 = arith.cmpi ne, %172, %c0_i32_208 : i32
    scf.if %173 {
      %c0_209 = arith.constant 0 : index
      %c0_210 = arith.constant 0 : index
      %174 = vector.load %arg9[%c0_209, %c0_210] : memref<8x256xf32, #tpu.memory_space<vmem>>, vector<8x256xf32>
      %c0_211 = arith.constant 0 : index
      %c0_212 = arith.constant 0 : index
      %175 = vector.load %arg6[%c0_211, %c0_212] : memref<8x1xf32, #tpu.memory_space<vmem>>, vector<8x1xf32>
      %176 = vector.broadcast %175 : vector<8x1xf32> to vector<8x256xf32>
      %177 = arith.addf %174, %176 : vector<8x256xf32>
      %cst_213 = arith.constant 0.000000e+00 : f32
      %178 = vector.broadcast %cst_213 : f32 to vector<8x256xf32>
      %179 = arith.maximumf %177, %178 : vector<8x256xf32>
      %c0_214 = arith.constant 0 : index
      %c0_215 = arith.constant 0 : index
      %c0_216 = arith.constant 0 : index
      %180 = vector.load %arg8[%c0_214, %c0_215, %c0_216] : memref<1x8x256xf32, #tpu.memory_space<vmem>>, vector<1x8x256xf32>
      %181 = vector.shape_cast %180 : vector<1x8x256xf32> to vector<8x256xf32>
      %182 = vector.shape_cast %179 : vector<8x256xf32> to vector<1x8x256xf32>
      tpu.vector_store %arg8[%c0_214, %c0_215, %c0_216], %182 {strides = array<i32>} : memref<1x8x256xf32, #tpu.memory_space<vmem>>, vector<1x8x256xf32>,
    } else {
    }
    return
  }
  func.func @transform_0(%arg0: i32, %arg1: i32) -> (i32, i32, i32, i32) {
    %c0_i32 = arith.constant 0 : i32
    %c0_i32_0 = arith.constant 0 : i32
    %c0_i32_1 = arith.constant 0 : i32
    return %arg0, %arg1, %c0_i32, %c0_i32_0 : i32, i32, i32, i32
  }
  func.func @transform_1(%arg0: i32, %arg1: i32) -> (i32, i32, i32, i32) {
    %c0_i32 = arith.constant 0 : i32
    %c0_i32_0 = arith.constant 0 : i32
    %c0_i32_1 = arith.constant 0 : i32
    return %arg0, %arg1, %c0_i32, %c0_i32_0 : i32, i32, i32, i32
  }
  func.func @transform_2(%arg0: i32, %arg1: i32) -> (i32, i32, i32, i32) {
    %c0_i32 = arith.constant 0 : i32
    %c0_i32_0 = arith.constant 0 : i32
    %c0_i32_1 = arith.constant 0 : i32
    %c0_i32_2 = arith.constant 0 : i32
    return %arg1, %c0_i32, %c0_i32_0, %c0_i32_1 : i32, i32, i32, i32
  }
  func.func @transform_3(%arg0: i32, %arg1: i32) -> (i32, i32, i32, i32) {
    %c0_i32 = arith.constant 0 : i32
    %c0_i32_0 = arith.constant 0 : i32
    %c0_i32_1 = arith.constant 0 : i32
    %c0_i32_2 = arith.constant 0 : i32
    return %arg1, %c0_i32, %c0_i32_0, %c0_i32_1 : i32, i32, i32, i32
  }
  func.func @transform_4(%arg0: i32, %arg1: i32) -> (i32, i32) {
    %c0_i32 = arith.constant 0 : i32
    %c0_i32_0 = arith.constant 0 : i32
    %c0_i32_1 = arith.constant 0 : i32
    return %c0_i32, %c0_i32_0 : i32, i32
  }
  func.func @transform_5(%arg0: i32, %arg1: i32) -> (i32, i32) {
    %c0_i32 = arith.constant 0 : i32
    %c0_i32_0 = arith.constant 0 : i32
    %c0_i32_1 = arith.constant 0 : i32
    return %c0_i32, %c0_i32_0 : i32, i32
  }
  func.func @transform_6(%arg0: i32, %arg1: i32) -> (i32, i32, i32) {
    %c0_i32 = arith.constant 0 : i32
    %c0_i32_0 = arith.constant 0 : i32
    %c0_i32_1 = arith.constant 0 : i32
    return %arg0, %c0_i32, %c0_i32_0 : i32, i32, i32
  }
}

</mosaic_0001>

<llo_original>
// kernel: tpu_custom_call.1
$region0: #{tpu_custom_call.1}
  #allocation0 [shape = 'u32[]', space=smem, size = 0x4, offset = 0x4, fixed_abs, tag = 'smem constant byte address 0x4 - core index']
  #allocation1 [shape = 'u32[144,128]{1,0:T(1,128)}', space=vmem, size = 0x12000, scoped, tag = 'internal scratch']
  #allocation2 [shape = 'f32[8,256]{1,0:T(8,128)}', space=vmem, size = 0x2000, scoped, tag = 'scratch operand']
  #allocation3 [shape = 'bf16[4,512]{1,0:T(4,128)(2,1)}', space=vmem, size = 0x1000, scoped, tag = 'scratch operand']
  #allocation4 [shape = 'bf16[4,512]{1,0:T(4,128)(2,1)}', space=vmem, size = 0x1000, scoped, tag = 'scratch operand']
  %s0 = inlined_call_operand.vmem [shape: f32[2,1,4,256], index: 0, kind: input, shape index: {}]
  %s1 = inlined_call_operand.vmem [shape: f32[2,1,4,256], index: 1, kind: input, shape index: {}]
  %s2 = inlined_call_operand.vmem [shape: bf16[1,9,8,4], index: 2, kind: input, shape index: {}]
  %s3 = inlined_call_operand.vmem [shape: bf16[1,9,8,4], index: 3, kind: input, shape index: {}]
  %s4 = inlined_call_operand.vmem [shape: f32[8,1], index: 4, kind: input, shape index: {}]
  %s5 = inlined_call_operand.vmem [shape: bf16[2,256], index: 5, kind: input, shape index: {}]
  %s6 = inlined_call_operand.hbm [shape: f32[2,8,256], index: 6, kind: output, shape index: {}]
  %s7 = sld [smem:[#allocation0]]
  $region65: #{tpu_custom_call.1} parent=0
    _
  %s9 = ssub.s32 1, %s7
  %s10 = scalar_select 0, %s9, %s7
  $region1: #{tpu_custom_call.1} parent=0
    #allocation5 [shape = 'u8[16384]{0}', space=vmem, size = 0x4000, scoped, tag = 'output window, operand 0']
    #allocation6 [shape = 's32[2]{0}', space=sflag, size = 0x8, scoped, tag = 'scoped memory for tpu_custom_call.1']
    %11 = vsyncpa [#allocation6], 0
    %s12 = scalar_lea.sflag [#allocation6], 1
    %13 = vsyncpa %s12, 0
    loop: start=0, step=1, limit=4
    $region2: #{tpu_custom_call.1} parent=1 // loop_pre_header
      _
    $region3: #{tpu_custom_call.1} parent=1 // loop_header
      %s15 = sphi 0, %s19
      %p16 = scmp.ge.s32.totalorder %s15, 4
      %s22 = sphi 0, %s34
      %s23 = sphi 0, %s30
      %s24 = sphi 0, %s22
      %s25 = sphi 0, %s23
      %s26 = sphi 0, %s24
      %s27 = sphi 0, %s25
      %s39 = sphi 0, %s41
      %s42 = sphi 0, %s39
      %s43 = sphi 0, %s42
      %s59 = sphi 0, %s43
      %s67 = sphi 0, %s69
      %s70 = sphi 0, %s67
      %s71 = sphi 0, %s70
      %s87 = sphi 0, %s71
      %s93 = sphi 0, %s95
      %s96 = sphi 0, %s93
      %s97 = sphi 0, %s96
      %s113 = sphi 0, %s97
      %s119 = sphi 0, %s121
      %s122 = sphi 0, %s119
      %s123 = sphi 0, %s122
      %s139 = sphi 0, %s123
      %s143 = sphi 0, %s143
      %s145 = sphi 0, %s143
      %s146 = sphi 0, %s145
      %s160 = sphi 0, %s146
      %s164 = sphi 0, %s164
      %s166 = sphi 0, %s164
      %s167 = sphi 0, %s166
      %s181 = sphi 0, %s167
      %s187 = sphi 0, %s189
      %s190 = sphi 0, %s187
      %s191 = sphi 0, %s190
      %s207 = sphi 0, %s191
    $region4: #{tpu_custom_call.1} parent=1 // loop_header_branch
      %18 = sbr.rel (%p16) target = $region8
    $region5: #{tpu_custom_call.1} parent=1 // loop_body
      %s20 = ssub.s32 %s15, 1
      %s21 = ssub.s32 %s15, 2
      %s28 = sadd.s32 1, %s23
      %p29 = scmp.ge.s32.totalorder %s28, 1
      %s30 = scalar_select %p29, 0, %s28
      %s31 = sadd.s32 1, %s22
      %s32 = scalar_select %p29, %s31, %s22
      %p33 = scmp.ge.s32.totalorder %s32, 2
      %s34 = scalar_select %p33, 0, %s32
      %s35 = ssub.s32 %s22, %s34
      %s36 = ssub.s32 %s23, %s30
      %s37 = sor.u32 %s35, %s36
      %p38 = scmp.eq.s32.totalorder %s37, 0
      %s40 = sadd.s32 %s39, 1
      %s41 = scalar_select %p38, %s39, %s40
      %p44 = pneg %p38
      %p45 = scmp.eq.s32.totalorder %s15, 1
      %p46 = por %p44, %p45
      %p47 = scmp.ne.s32.totalorder %s39, %s42
      %p48 = scmp.eq.s32.totalorder %s15, 0
      %p49 = por %p47, %p48
      %p50 = scmp.ne.s32.totalorder %s39, %s42
      %p51 = scmp.eq.s32.totalorder %s20, 1
      %p52 = por %p50, %p51
      %p53 = scmp.ne.s32.totalorder %s42, %s43
      %p54 = scmp.eq.s32.totalorder %s20, 0
      %p55 = por %p53, %p54
      %p56 = scmp.ne.s32.totalorder %s42, %s43
      %p57 = scmp.eq.s32.totalorder %s21, 1
      %p58 = por %p56, %p57
      %p60 = scmp.ne.s32.totalorder %s43, %s59
      %p61 = scmp.eq.s32.totalorder %s21, 0
      %p62 = por %p60, %p61
      %s63 = ssub.s32 %s22, %s34
      %s64 = ssub.s32 %s23, %s30
      %s65 = sor.u32 %s63, %s64
      %p66 = scmp.eq.s32.totalorder %s65, 0
      %s68 = sadd.s32 %s67, 1
      %s69 = scalar_select %p66, %s67, %s68
      %p72 = pneg %p66
      %p73 = scmp.eq.s32.totalorder %s15, 1
      %p74 = por %p72, %p73
      %p75 = scmp.ne.s32.totalorder %s67, %s70
      %p76 = scmp.eq.s32.totalorder %s15, 0
      %p77 = por %p75, %p76
      %p78 = scmp.ne.s32.totalorder %s67, %s70
      %p79 = scmp.eq.s32.totalorder %s20, 1
      %p80 = por %p78, %p79
      %p81 = scmp.ne.s32.totalorder %s70, %s71
      %p82 = scmp.eq.s32.totalorder %s20, 0
      %p83 = por %p81, %p82
      %p84 = scmp.ne.s32.totalorder %s70, %s71
      %p85 = scmp.eq.s32.totalorder %s21, 1
      %p86 = por %p84, %p85
      %p88 = scmp.ne.s32.totalorder %s71, %s87
      %p89 = scmp.eq.s32.totalorder %s21, 0
      %p90 = por %p88, %p89
      %s91 = ssub.s32 %s23, %s30
      %p92 = scmp.eq.s32.totalorder %s91, 0
      %s94 = sadd.s32 %s93, 1
      %s95 = scalar_select %p92, %s93, %s94
      %p98 = pneg %p92
      %p99 = scmp.eq.s32.totalorder %s15, 1
      %p100 = por %p98, %p99
      %p101 = scmp.ne.s32.totalorder %s93, %s96
      %p102 = scmp.eq.s32.totalorder %s15, 0
      %p103 = por %p101, %p102
      %p104 = scmp.ne.s32.totalorder %s93, %s96
      %p105 = scmp.eq.s32.totalorder %s20, 1
      %p106 = por %p104, %p105
      %p107 = scmp.ne.s32.totalorder %s96, %s97
      %p108 = scmp.eq.s32.totalorder %s20, 0
      %p109 = por %p107, %p108
      %p110 = scmp.ne.s32.totalorder %s96, %s97
      %p111 = scmp.eq.s32.totalorder %s21, 1
      %p112 = por %p110, %p111
      %p114 = scmp.ne.s32.totalorder %s97, %s113
      %p115 = scmp.eq.s32.totalorder %s21, 0
      %p116 = por %p114, %p115
      %s117 = ssub.s32 %s23, %s30
      %p118 = scmp.eq.s32.totalorder %s117, 0
      %s120 = sadd.s32 %s119, 1
      %s121 = scalar_select %p118, %s119, %s120
      %p124 = pneg %p118
      %p125 = scmp.eq.s32.totalorder %s15, 1
      %p126 = por %p124, %p125
      %p127 = scmp.ne.s32.totalorder %s119, %s122
      %p128 = scmp.eq.s32.totalorder %s15, 0
      %p129 = por %p127, %p128
      %p130 = scmp.ne.s32.totalorder %s119, %s122
      %p131 = scmp.eq.s32.totalorder %s20, 1
      %p132 = por %p130, %p131
      %p133 = scmp.ne.s32.totalorder %s122, %s123
      %p134 = scmp.eq.s32.totalorder %s20, 0
      %p135 = por %p133, %p134
      %p136 = scmp.ne.s32.totalorder %s122, %s123
      %p137 = scmp.eq.s32.totalorder %s21, 1
      %p138 = por %p136, %p137
      %p140 = scmp.ne.s32.totalorder %s123, %s139
      %p141 = scmp.eq.s32.totalorder %s21, 0
      %p142 = por %p140, %p141
      %s144 = sadd.s32 %s143, 1
      %p147 = scmp.eq.s32.totalorder %s15, 1
      %p148 = scmp.ne.s32.totalorder %s143, %s145
      %p149 = scmp.eq.s32.totalorder %s15, 0
      %p150 = por %p148, %p149
      %p151 = scmp.ne.s32.totalorder %s143, %s145
      %p152 = scmp.eq.s32.totalorder %s20, 1
      %p153 = por %p151, %p152
      %p154 = scmp.ne.s32.totalorder %s145, %s146
      %p155 = scmp.eq.s32.totalorder %s20, 0
      %p156 = por %p154, %p155
      %p157 = scmp.ne.s32.totalorder %s145, %s146
      %p158 = scmp.eq.s32.totalorder %s21, 1
      %p159 = por %p157, %p158
      %p161 = scmp.ne.s32.totalorder %s146, %s160
      %p162 = scmp.eq.s32.totalorder %s21, 0
      %p163 = por %p161, %p162
      %s165 = sadd.s32 %s164, 1
      %p168 = scmp.eq.s32.totalorder %s15, 1
      %p169 = scmp.ne.s32.totalorder %s164, %s166
      %p170 = scmp.eq.s32.totalorder %s15, 0
      %p171 = por %p169, %p170
      %p172 = scmp.ne.s32.totalorder %s164, %s166
      %p173 = scmp.eq.s32.totalorder %s20, 1
      %p174 = por %p172, %p173
      %p175 = scmp.ne.s32.totalorder %s166, %s167
      %p176 = scmp.eq.s32.totalorder %s20, 0
      %p177 = por %p175, %p176
      %p178 = scmp.ne.s32.totalorder %s166, %s167
      %p179 = scmp.eq.s32.totalorder %s21, 1
      %p180 = por %p178, %p179
      %p182 = scmp.ne.s32.totalorder %s167, %s181
      %p183 = scmp.eq.s32.totalorder %s21, 0
      %p184 = por %p182, %p183
      %s185 = ssub.s32 %s22, %s34
      %p186 = scmp.eq.s32.totalorder %s185, 0
      %s188 = sadd.s32 %s187, 1
      %s189 = scalar_select %p186, %s187, %s188
      %p192 = pneg %p186
      %p193 = scmp.eq.s32.totalorder %s15, 1
      %p194 = por %p192, %p193
      %p195 = scmp.ne.s32.totalorder %s187, %s190
      %p196 = scmp.eq.s32.totalorder %s15, 0
      %p197 = por %p195, %p196
      %p198 = scmp.ne.s32.totalorder %s187, %s190
      %p199 = scmp.eq.s32.totalorder %s20, 1
      %p200 = por %p198, %p199
      %p201 = scmp.ne.s32.totalorder %s190, %s191
      %p202 = scmp.eq.s32.totalorder %s20, 0
      %p203 = por %p201, %p202
      %p204 = scmp.ne.s32.totalorder %s190, %s191
      %p205 = scmp.eq.s32.totalorder %s21, 1
      %p206 = por %p204, %p205
      %p208 = scmp.ne.s32.totalorder %s191, %s207
      %p209 = scmp.eq.s32.totalorder %s21, 0
      %p210 = por %p208, %p209
      %p211 = scmp.le.s32.totalorder 1, %s15
      %p212 = scmp.lt.s32.totalorder %s15, 3
      %p213 = pnand %p211, %p212
      %p214 = pneg %p213
      // Predicated region
      $region9: #{tpu_custom_call.1} parent=5 // pred_check
        _
      $region10: #{tpu_custom_call.1} parent=5 // pred_check_branch
        %216 = sbr.rel (%p213) target = $region12
      $region11: #{tpu_custom_call.1} parent=5 // pred_region
        %s217 = ssub.s32 %s15, 1
        // Predicated region
        $region13: #{tpu_custom_call.1} parent=11 // pred_check
          %p218 = pneg %p109
        $region14: #{tpu_custom_call.1} parent=11 // pred_check_branch
          %220 = sbr.rel (%p218) target = $region16
        $region15: #{tpu_custom_call.1} parent=11 // pred_region
          %p221 = scmp.lt.s32.totalorder %s25, 0
          %s222 = scalar_select %p221, %s25, 0
          %s223 = smul.addr %s222, 9
          %s224 = smul.addr %s223, 4
          %s225 = scalar_lea.vmem %s2, %s224
        $region16: #{tpu_custom_call.1} parent=11 // pred_fallthru
          _
        // Predicated region
        $region17: #{tpu_custom_call.1} parent=11 // pred_check
          %p226 = pneg %p135
        $region18: #{tpu_custom_call.1} parent=11 // pred_check_branch
          %228 = sbr.rel (%p226) target = $region20
        $region19: #{tpu_custom_call.1} parent=11 // pred_region
          %p229 = scmp.lt.s32.totalorder %s25, 0
          %s230 = scalar_select %p229, %s25, 0
          %s231 = smul.addr %s230, 9
          %s232 = smul.addr %s231, 4
          %s233 = scalar_lea.vmem %s3, %s232
        $region20: #{tpu_custom_call.1} parent=11 // pred_fallthru
          _
        // Predicated region
        $region21: #{tpu_custom_call.1} parent=11 // pred_check
          %p234 = pneg %p156
        $region22: #{tpu_custom_call.1} parent=11 // pred_check_branch
          %236 = sbr.rel (%p234) target = $region24
        $region23: #{tpu_custom_call.1} parent=11 // pred_region
          _
        $region24: #{tpu_custom_call.1} parent=11 // pred_fallthru
          _
        // Predicated region
        $region25: #{tpu_custom_call.1} parent=11 // pred_check
          %p237 = pneg %p177
        $region26: #{tpu_custom_call.1} parent=11 // pred_check_branch
          %239 = sbr.rel (%p237) target = $region28
        $region27: #{tpu_custom_call.1} parent=11 // pred_region
          _
        $region28: #{tpu_custom_call.1} parent=11 // pred_fallthru
          _
      $region12: #{tpu_custom_call.1} parent=5 // pred_fallthru
        _
      %p240 = scmp.lt.s32.totalorder %s15, 2
      // Predicated region
      $region29: #{tpu_custom_call.1} parent=5 // pred_check
        %p241 = pneg %p240
      $region30: #{tpu_custom_call.1} parent=5 // pred_check_branch
        %243 = sbr.rel (%p241) target = $region32
      $region31: #{tpu_custom_call.1} parent=5 // pred_region
        // Predicated region
        $region33: #{tpu_custom_call.1} parent=31 // pred_check
          %p244 = pneg %p49
        $region34: #{tpu_custom_call.1} parent=31 // pred_check_branch
          %246 = sbr.rel (%p244) target = $region36
        $region35: #{tpu_custom_call.1} parent=31 // pred_region
          %p247 = scmp.lt.s32.totalorder %s22, 1
          %s248 = scalar_select %p247, %s22, 1
          %p249 = scmp.lt.s32.totalorder %s23, 0
          %s250 = scalar_select %p249, %s23, 0
          %s251 = smul.addr %s250, 2
          %s252 = smul.addr %s248, 2
          %s253 = sadd.s32 %s251, %s252
          %s254 = smul.addr %s253, 4
          %s255 = scalar_lea.vmem %s0, %s254
        $region36: #{tpu_custom_call.1} parent=31 // pred_fallthru
          _
        // Predicated region
        $region37: #{tpu_custom_call.1} parent=31 // pred_check
          %p256 = pneg %p77
        $region38: #{tpu_custom_call.1} parent=31 // pred_check_branch
          %258 = sbr.rel (%p256) target = $region40
        $region39: #{tpu_custom_call.1} parent=31 // pred_region
          %p259 = scmp.lt.s32.totalorder %s22, 1
          %s260 = scalar_select %p259, %s22, 1
          %p261 = scmp.lt.s32.totalorder %s23, 0
          %s262 = scalar_select %p261, %s23, 0
          %s263 = smul.addr %s262, 2
          %s264 = smul.addr %s260, 2
          %s265 = sadd.s32 %s263, %s264
          %s266 = smul.addr %s265, 4
          %s267 = scalar_lea.vmem %s1, %s266
        $region40: #{tpu_custom_call.1} parent=31 // pred_fallthru
          _
      $region32: #{tpu_custom_call.1} parent=5 // pred_fallthru
        _
      %p268 = scmp.le.s32.totalorder 1, %s15
      %p269 = scmp.lt.s32.totalorder %s15, 3
      %p270 = pnand %p268, %p269
      %p271 = pneg %p270
      // Predicated region
      $region41: #{tpu_custom_call.1} parent=5 // pred_check
        _
      $region42: #{tpu_custom_call.1} parent=5 // pred_check_branch
        %273 = sbr.rel (%p270) target = $region44
      $region43: #{tpu_custom_call.1} parent=5 // pred_region
        %s274 = ssub.s32 %s15, 1
        %p275 = scmp.lt.s32.totalorder %s24, 1
        %s276 = scalar_select %p275, %s24, 1
        %p277 = scmp.lt.s32.totalorder %s25, 0
        %s278 = scalar_select %p277, %s25, 0
        %s279 = smul.addr %s278, 2
        %s280 = smul.addr %s276, 2
        %s281 = sadd.s32 %s279, %s280
        %s282 = smul.addr %s281, 4
        %s283 = scalar_lea.vmem %s0, %s282
        %p284 = pneg %p55
        %p285 = pneg %p52
        %p286 = scmp.lt.s32.totalorder %s24, 1
        %s287 = scalar_select %p286, %s24, 1
        %p288 = scmp.lt.s32.totalorder %s25, 0
        %s289 = scalar_select %p288, %s25, 0
        %s290 = smul.addr %s289, 2
        %s291 = smul.addr %s287, 2
        %s292 = sadd.s32 %s290, %s291
        %s293 = smul.addr %s292, 4
        %s294 = scalar_lea.vmem %s1, %s293
        %p295 = pneg %p83
        %p296 = pneg %p80
        %p297 = scmp.lt.s32.totalorder %s25, 0
        %s298 = scalar_select %p297, %s25, 0
        %s299 = smul.addr %s298, 9
        %s300 = smul.addr %s299, 4
        %s301 = scalar_lea.vmem %s2, %s300
        %p302 = pneg %p109
        %p303 = pneg %p106
        %p304 = scmp.lt.s32.totalorder %s25, 0
        %s305 = scalar_select %p304, %s25, 0
        %s306 = smul.addr %s305, 9
        %s307 = smul.addr %s306, 4
        %s308 = scalar_lea.vmem %s3, %s307
        %p309 = pneg %p135
        %p310 = pneg %p132
        %p311 = pneg %p156
        %p312 = pneg %p153
        %p313 = pneg %p177
        %p314 = pneg %p174
        %p315 = pneg %p203
        %p316 = pneg %p200
        %s317 = sand.u32 %s190, 1
        %s318 = scalar_lea.sflag [#allocation6], %s317
        %s319 = sand.u32 %s190, 1
        %s320 = smul.addr %s319, 16
        %s321 = scalar_lea.vmem [#allocation5], %s320
        %p322 = scmp.lt.s32.totalorder %s24, 1
        %s323 = scalar_select %p322, %s24, 1
        %p324 = scmp.lt.s32.totalorder %s25, 0
        %s325 = scalar_select %p324, %s25, 0
        %s326 = smul.addr %s325, 2
        %s327 = smul.addr %s323, 2
        %s328 = sadd.s32 %s326, %s327
        %s329 = smul.addr %s328, 4
        %s330 = scalar_lea.vmem %s0, %s329
        %p331 = scmp.lt.s32.totalorder %s24, 1
        %s332 = scalar_select %p331, %s24, 1
        %p333 = scmp.lt.s32.totalorder %s25, 0
        %s334 = scalar_select %p333, %s25, 0
        %s335 = smul.addr %s334, 2
        %s336 = smul.addr %s332, 2
        %s337 = sadd.s32 %s335, %s336
        %s338 = smul.addr %s337, 4
        %s339 = scalar_lea.vmem %s1, %s338
        %p340 = scmp.lt.s32.totalorder %s25, 0
        %s341 = scalar_select %p340, %s25, 0
        %s342 = smul.addr %s341, 9
        %s343 = smul.addr %s342, 4
        %s344 = scalar_lea.vmem %s2, %s343
        %p345 = scmp.lt.s32.totalorder %s25, 0
        %s346 = scalar_select %p345, %s25, 0
        %s347 = smul.addr %s346, 9
        %s348 = smul.addr %s347, 4
        %s349 = scalar_lea.vmem %s3, %s348
        %p351 = scmp.eq.s32.totalorder %s25, 0
        // Predicated region
        $region45: #{tpu_custom_call.1} parent=43 // pred_check
          %p352 = pneg %p351
        $region46: #{tpu_custom_call.1} parent=43 // pred_check_branch
          %354 = sbr.rel (%p352) target = $region48
        $region47: #{tpu_custom_call.1} parent=43 // pred_region
          %355 = vst [vmem:[#allocation2] sm:$0xff] 0.0
          %356 = vst [vmem:[#allocation2 + $0x8] sm:$0xff] 0.0
        $region48: #{tpu_custom_call.1} parent=43 // pred_fallthru
          _
        %v357 = vld [vmem:[%s5] sm:$0x3]
        %358 = vst [vmem:[#allocation3] sm:$0x3] 0
        %359 = vst [vmem:[#allocation3 + $0x6] sm:$0x3] 0
        %v360 = vld [vmem:[%s330] sm:$0xff]
        %v362 = vcombine.high %v360, %v360
        %v364 = vpack.c.bf16 %v360, %v360
        %v365 = vpack.c.bf16 %v362, %v362
        %v368 = vcombine.low %v364, %v365
        %v370 = vunpack.c.l.s4 1983009808
        %v371 = vunpack.c.0.s8 %v370
        %v372 = vlaneseq
        %v373 = vshrl.u32 %v372, 7
        %v374 = vsub.s32 %v371, %v373
        %v375 = vrot.slane %v368, %v374
        %377 = vst [vmem:[#allocation3 + $0x2] sm:$0xf] %v375
        %v378 = vld [vmem:[#allocation3] sm:$0x3f]
        %v381 = vunpack.c.l.s4 1966171168
        %v382 = vunpack.c.0.s8 %v381
        %v383 = vlaneseq
        %v384 = vshrl.u32 %v383, 7
        %v385 = vsub.s32 %v382, %v384
        %v386 = vrot.slane %v357, %v385
        %v387 = vcombine.high %v386, %v386
        %v389 = vunpack.c.l.s4 1966171168
        %v390 = vunpack.c.0.s8 %v389
        %v391 = vlaneseq
        %v392 = vshrl.u32 %v391, 7
        %v393 = vsub.s32 %v390, %v392
        %v394 = vrot.slane %v386, %v393
        %v396 = vunpack.c.l.s4 1966171168
        %v397 = vunpack.c.0.s8 %v396
        %v398 = vlaneseq
        %v399 = vshrl.u32 %v398, 7
        %v400 = vsub.s32 %v397, %v399
        %v401 = vrot.slane %v387, %v400
        %v403 = vpack.i.b16 %v394, %v394
        %v405 = vlaneseq
        %v406 = vshrl.u32 %v405, 7
        %v407 = vsub.s32 0, %v406
        %v408 = vrot.slane %v403, %v407
        %v410 = vpack.i.b16 %v401, %v401
        %v412 = vlaneseq
        %v413 = vshrl.u32 %v412, 7
        %v414 = vsub.s32 0, %v413
        %v415 = vrot.slane %v410, %v414
        %v418 = vcombine.low %v408, %v415
        %v420 = vunpack.c.l.s4 1983009808
        %v421 = vunpack.c.0.s8 %v420
        %v422 = vlaneseq
        %v423 = vshrl.u32 %v422, 7
        %v424 = vsub.s32 %v421, %v423
        %v425 = vrot.slane %v418, %v424
        %426 = vrot.lane.b32.xlu0 %v425, 111
        %v427 = vpop.permute.xlu0 %426
        %v428 = vrot.slane %v427, 6
        %vm429 = vcmask 908288
        %v430 = vsel %vm429, %v428, %v427
        %v432 = vmul.bf16 %v378, %v430
        %v433 = vld [vmem:[#allocation2] sm:$0xff]
        %v434 = vld [vmem:[#allocation2 + $0x8] sm:$0xff]
        %v435 = vld [vmem:[%s344] sm:$0xf]
        %v437 = vcombine.high %v432, %v432
        %v439 = vunpack.c.l.s4 1983009808
        %v440 = vunpack.c.0.s8 %v439
        %v441 = vlaneseq
        %v442 = vshrl.u32 %v441, 7
        %v443 = vsub.s32 %v440, %v442
        %v444 = vrot.slane %v432, %v443
        %v446 = vunpack.c.l.s4 1983009808
        %v447 = vunpack.c.0.s8 %v446
        %v448 = vlaneseq
        %v449 = vshrl.u32 %v448, 7
        %v450 = vsub.s32 %v447, %v449
        %v451 = vrot.slane %v437, %v450
        %v452 = vcombine.high %v444, %v444
        %453 = vrot.lane.b32.xlu0 %v444, 17
        %v454 = vpop.permute.xlu0 %453
        %455 = vrot.lane.b32.xlu0 %v452, 17
        %v456 = vpop.permute.xlu0 %455
        %457 = vrot.lane.b32.xlu0 %v451, 17
        %v458 = vpop.permute.xlu0 %457
        %vm459 = vcmask 138240
        %v460 = vsel %vm459, %v454, %v456
        %v461 = vsel %vm459, %v456, %v458
        %vm462 = vcmask 31744
        %v464 = vsel %vm462, %v435, 0
        %vm466 = vcmask 1041408
        %v468 = vsel %vm466, %v460, 0
        %v471 = vsel %vm466, %v461, 0
        %473 = vmatprep.subr.bf16.mxu0 %v471
        %474 = vmatpush1.bf16.msra.mxu0 %v468
        %475 = vmatprep.subr.bf16.mxu0 0
        %476 = vmatpush1.bf16.msra.mxu0 0
        %477 = vmatprep.subr.bf16.mxu0 0
        %478 = vmatpush1.bf16.msra.mxu0 0
        %479 = vmatprep.subr.bf16.mxu0 0
        %480 = vmatpush1.bf16.msra.mxu0 0
        %481 = vmatprep.subr.bf16.mxu0 0
        %482 = vmatpush1.bf16.msra.mxu0 0
        %483 = vmatprep.subr.bf16.mxu0 0
        %484 = vmatpush1.bf16.msra.mxu0 0
        %485 = vmatprep.subr.bf16.mxu0 0
        %486 = vmatpush1.bf16.msra.mxu0 0
        %487 = vmatprep.subr.bf16.mxu0 0
        %488 = vmatpush1.bf16.msra.mxu0 0
        %489 = vmatprep.subr.bf16.mxu0 0
        %490 = vmatpush1.bf16.msra.mxu0 0
        %491 = vmatprep.subr.bf16.mxu0 0
        %492 = vmatpush1.bf16.msra.mxu0 0
        %493 = vmatprep.subr.bf16.mxu0 0
        %494 = vmatpush1.bf16.msra.mxu0 0
        %495 = vmatprep.subr.bf16.mxu0 0
        %496 = vmatpush1.bf16.msra.mxu0 0
        %497 = vmatprep.subr.bf16.mxu0 0
        %498 = vmatpush1.bf16.msra.mxu0 0
        %499 = vmatprep.subr.bf16.mxu0 0
        %500 = vmatpush1.bf16.msra.mxu0 0
        %501 = vmatprep.subr.bf16.mxu0 0
        %502 = vmatpush1.bf16.msra.mxu0 0
        %503 = vmatprep.subr.bf16.mxu0 0
        %504 = vmatpush1.bf16.msra.mxu0 0
        %505 = vmatprep.mubr.bf16.mxu0 0
        %506 = vmatmul.mubr.bf16.gmra.mrb[0].mxu0 %v464
        %v507 = vpop.f32.mrb[0].mxu0
        %v508 = vadd.f32 0.0, %v507
        %v509 = vpop.f32.mrb[0].mxu0
        %v510 = vadd.f32 0.0, %v509
        %v511 = vpop.f32.mrb[0].mxu0
        %v512 = vpop.f32.mrb[0].mxu0
        %513 = vdwg.mxu0
        %v514 = vadd.f32 %v433, %v508
        %v515 = vadd.f32 %v434, %v510
        %516 = vst [vmem:[#allocation2] sm:$0xff] %v514
        %517 = vst [vmem:[#allocation2 + $0x8] sm:$0xff] %v515
        %v518 = vld [vmem:[#allocation3] sm:$0x3f]
        %v519 = vld [vmem:[#allocation2] sm:$0xff]
        %v520 = vld [vmem:[#allocation2 + $0x8] sm:$0xff]
        %s521 = scalar_lea.vmem %s344, 4
        %v522 = vld [vmem:[%s521] sm:$0xf]
        %v524 = vcombine.high %v518, %v518
        %v526 = vunpack.c.l.s4 1983009808
        %v527 = vunpack.c.0.s8 %v526
        %v528 = vlaneseq
        %v529 = vshrl.u32 %v528, 7
        %v530 = vsub.s32 %v527, %v529
        %v531 = vrot.slane %v518, %v530
        %v533 = vunpack.c.l.s4 1983009808
        %v534 = vunpack.c.0.s8 %v533
        %v535 = vlaneseq
        %v536 = vshrl.u32 %v535, 7
        %v537 = vsub.s32 %v534, %v536
        %v538 = vrot.slane %v524, %v537
        %v539 = vcombine.high %v531, %v531
        %540 = vrot.lane.b32.xlu0 %v531, 16
        %v541 = vpop.permute.xlu0 %540
        %542 = vrot.lane.b32.xlu0 %v539, 16
        %v543 = vpop.permute.xlu0 %542
        %544 = vrot.lane.b32.xlu0 %v538, 16
        %v545 = vpop.permute.xlu0 %544
        %vm546 = vcmask 130048
        %v547 = vsel %vm546, %v541, %v543
        %v548 = vsel %vm546, %v543, %v545
        %v550 = vsel %vm462, %v522, 0
        %v553 = vsel %vm466, %v547, 0
        %v556 = vsel %vm466, %v548, 0
        %558 = vmatprep.subr.bf16.mxu0 %v556
        %559 = vmatpush1.bf16.msra.mxu0 %v553
        %560 = vmatprep.subr.bf16.mxu0 0
        %561 = vmatpush1.bf16.msra.mxu0 0
        %562 = vmatprep.subr.bf16.mxu0 0
        %563 = vmatpush1.bf16.msra.mxu0 0
        %564 = vmatprep.subr.bf16.mxu0 0
        %565 = vmatpush1.bf16.msra.mxu0 0
        %566 = vmatprep.subr.bf16.mxu0 0
        %567 = vmatpush1.bf16.msra.mxu0 0
        %568 = vmatprep.subr.bf16.mxu0 0
        %569 = vmatpush1.bf16.msra.mxu0 0
        %570 = vmatprep.subr.bf16.mxu0 0
        %571 = vmatpush1.bf16.msra.mxu0 0
        %572 = vmatprep.subr.bf16.mxu0 0
        %573 = vmatpush1.bf16.msra.mxu0 0
        %574 = vmatprep.subr.bf16.mxu0 0
        %575 = vmatpush1.bf16.msra.mxu0 0
        %576 = vmatprep.subr.bf16.mxu0 0
        %577 = vmatpush1.bf16.msra.mxu0 0
        %578 = vmatprep.subr.bf16.mxu0 0
        %579 = vmatpush1.bf16.msra.mxu0 0
        %580 = vmatprep.subr.bf16.mxu0 0
        %581 = vmatpush1.bf16.msra.mxu0 0
        %582 = vmatprep.subr.bf16.mxu0 0
        %583 = vmatpush1.bf16.msra.mxu0 0
        %584 = vmatprep.subr.bf16.mxu0 0
        %585 = vmatpush1.bf16.msra.mxu0 0
        %586 = vmatprep.subr.bf16.mxu0 0
        %587 = vmatpush1.bf16.msra.mxu0 0
        %588 = vmatprep.subr.bf16.mxu0 0
        %589 = vmatpush1.bf16.msra.mxu0 0
        %590 = vmatprep.mubr.bf16.mxu0 0
        %591 = vmatmul.mubr.bf16.gmra.mrb[0].mxu0 %v550
        %v592 = vpop.f32.mrb[0].mxu0
        %v593 = vadd.f32 0.0, %v592
        %v594 = vpop.f32.mrb[0].mxu0
        %v595 = vadd.f32 0.0, %v594
        %v596 = vpop.f32.mrb[0].mxu0
        %v597 = vpop.f32.mrb[0].mxu0
        %598 = vdwg.mxu0
        %v599 = vadd.f32 %v519, %v593
        %v600 = vadd.f32 %v520, %v595
        %601 = vst [vmem:[#allocation2] sm:$0xff] %v599
        %602 = vst [vmem:[#allocation2 + $0x8] sm:$0xff] %v600
        %v603 = vld [vmem:[#allocation3] sm:$0x3f]
        %v604 = vshrl.u32 %v394, 16
        %v605 = vpack.i.b16 %v604, %v604
        %v607 = vlaneseq
        %v608 = vshrl.u32 %v607, 7
        %v609 = vsub.s32 0, %v608
        %v610 = vrot.slane %v605, %v609
        %v611 = vshrl.u32 %v401, 16
        %v612 = vpack.i.b16 %v611, %v611
        %v614 = vlaneseq
        %v615 = vshrl.u32 %v614, 7
        %v616 = vsub.s32 0, %v615
        %v617 = vrot.slane %v612, %v616
        %v620 = vcombine.low %v610, %v617
        %v622 = vunpack.c.l.s4 1983009808
        %v623 = vunpack.c.0.s8 %v622
        %v624 = vlaneseq
        %v625 = vshrl.u32 %v624, 7
        %v626 = vsub.s32 %v623, %v625
        %v627 = vrot.slane %v620, %v626
        %628 = vrot.lane.b32.xlu0 %v627, 113
        %v629 = vpop.permute.xlu0 %628
        %v630 = vrot.slane %v629, 6
        %vm631 = vcmask 924672
        %v632 = vsel %vm631, %v630, %v629
        %v634 = vmul.bf16 %v603, %v632
        %v635 = vld [vmem:[#allocation2] sm:$0xff]
        %v636 = vld [vmem:[#allocation2 + $0x8] sm:$0xff]
        %s637 = scalar_lea.vmem %s344, 8
        %v638 = vld [vmem:[%s637] sm:$0xf]
        %v640 = vcombine.high %v634, %v634
        %v642 = vunpack.c.l.s4 1983009808
        %v643 = vunpack.c.0.s8 %v642
        %v644 = vlaneseq
        %v645 = vshrl.u32 %v644, 7
        %v646 = vsub.s32 %v643, %v645
        %v647 = vrot.slane %v634, %v646
        %v649 = vunpack.c.l.s4 1983009808
        %v650 = vunpack.c.0.s8 %v649
        %v651 = vlaneseq
        %v652 = vshrl.u32 %v651, 7
        %v653 = vsub.s32 %v650, %v652
        %v654 = vrot.slane %v640, %v653
        %v655 = vcombine.high %v647, %v647
        %656 = vrot.lane.b32.xlu0 %v647, 15
        %v657 = vpop.permute.xlu0 %656
        %658 = vrot.lane.b32.xlu0 %v655, 15
        %v659 = vpop.permute.xlu0 %658
        %660 = vrot.lane.b32.xlu0 %v654, 15
        %v661 = vpop.permute.xlu0 %660
        %vm662 = vcmask 121856
        %v663 = vsel %vm662, %v657, %v659
        %v664 = vsel %vm662, %v659, %v661
        %v666 = vsel %vm462, %v638, 0
        %v669 = vsel %vm466, %v663, 0
        %v672 = vsel %vm466, %v664, 0
        %674 = vmatprep.subr.bf16.mxu0 %v672
        %675 = vmatpush1.bf16.msra.mxu0 %v669
        %676 = vmatprep.subr.bf16.mxu0 0
        %677 = vmatpush1.bf16.msra.mxu0 0
        %678 = vmatprep.subr.bf16.mxu0 0
        %679 = vmatpush1.bf16.msra.mxu0 0
        %680 = vmatprep.subr.bf16.mxu0 0
        %681 = vmatpush1.bf16.msra.mxu0 0
        %682 = vmatprep.subr.bf16.mxu0 0
        %683 = vmatpush1.bf16.msra.mxu0 0
        %684 = vmatprep.subr.bf16.mxu0 0
        %685 = vmatpush1.bf16.msra.mxu0 0
        %686 = vmatprep.subr.bf16.mxu0 0
        %687 = vmatpush1.bf16.msra.mxu0 0
        %688 = vmatprep.subr.bf16.mxu0 0
        %689 = vmatpush1.bf16.msra.mxu0 0
        %690 = vmatprep.subr.bf16.mxu0 0
        %691 = vmatpush1.bf16.msra.mxu0 0
        %692 = vmatprep.subr.bf16.mxu0 0
        %693 = vmatpush1.bf16.msra.mxu0 0
        %694 = vmatprep.subr.bf16.mxu0 0
        %695 = vmatpush1.bf16.msra.mxu0 0
        %696 = vmatprep.subr.bf16.mxu0 0
        %697 = vmatpush1.bf16.msra.mxu0 0
        %698 = vmatprep.subr.bf16.mxu0 0
        %699 = vmatpush1.bf16.msra.mxu0 0
        %700 = vmatprep.subr.bf16.mxu0 0
        %701 = vmatpush1.bf16.msra.mxu0 0
        %702 = vmatprep.subr.bf16.mxu0 0
        %703 = vmatpush1.bf16.msra.mxu0 0
        %704 = vmatprep.subr.bf16.mxu0 0
        %705 = vmatpush1.bf16.msra.mxu0 0
        %706 = vmatprep.mubr.bf16.mxu0 0
        %707 = vmatmul.mubr.bf16.gmra.mrb[0].mxu0 %v666
        %v708 = vpop.f32.mrb[0].mxu0
        %v709 = vadd.f32 0.0, %v708
        %v710 = vpop.f32.mrb[0].mxu0
        %v711 = vadd.f32 0.0, %v710
        %v712 = vpop.f32.mrb[0].mxu0
        %v713 = vpop.f32.mrb[0].mxu0
        %714 = vdwg.mxu0
        %v715 = vadd.f32 %v635, %v709
        %v716 = vadd.f32 %v636, %v711
        %717 = vst [vmem:[#allocation2] sm:$0xff] %v715
        %718 = vst [vmem:[#allocation2 + $0x8] sm:$0xff] %v716
        %v719 = vld [vmem:[#allocation3] sm:$0x3f]
        %720 = vrot.lane.b32.xlu0 %v425, 127
        %v721 = vpop.permute.xlu0 %720
        %v722 = vrot.slane %v721, 6
        %vm723 = vcmask 1039360
        %v724 = vsel %vm723, %v722, %v721
        %v726 = vmul.bf16 %v719, %v724
        %v727 = vld [vmem:[#allocation2] sm:$0xff]
        %v728 = vld [vmem:[#allocation2 + $0x8] sm:$0xff]
        %s729 = scalar_lea.vmem %s344, 12
        %v730 = vld [vmem:[%s729] sm:$0xf]
        %v732 = vcombine.high %v726, %v726
        %v734 = vunpack.c.l.s4 1983009808
        %v735 = vunpack.c.0.s8 %v734
        %v736 = vlaneseq
        %v737 = vshrl.u32 %v736, 7
        %v738 = vsub.s32 %v735, %v737
        %v739 = vrot.slane %v726, %v738
        %v741 = vunpack.c.l.s4 1983009808
        %v742 = vunpack.c.0.s8 %v741
        %v743 = vlaneseq
        %v744 = vshrl.u32 %v743, 7
        %v745 = vsub.s32 %v742, %v744
        %v746 = vrot.slane %v732, %v745
        %v747 = vcombine.high %v739, %v739
        %748 = vrot.lane.b32.xlu0 %v739, 1
        %v749 = vpop.permute.xlu0 %748
        %750 = vrot.lane.b32.xlu0 %v747, 1
        %v751 = vpop.permute.xlu0 %750
        %752 = vrot.lane.b32.xlu0 %v746, 1
        %v753 = vpop.permute.xlu0 %752
        %vm754 = vcmask 7168
        %v755 = vsel %vm754, %v749, %v751
        %v756 = vsel %vm754, %v751, %v753
        %v758 = vsel %vm462, %v730, 0
        %v761 = vsel %vm466, %v755, 0
        %v764 = vsel %vm466, %v756, 0
        %766 = vmatprep.subr.bf16.mxu0 %v764
        %767 = vmatpush1.bf16.msra.mxu0 %v761
        %768 = vmatprep.subr.bf16.mxu0 0
        %769 = vmatpush1.bf16.msra.mxu0 0
        %770 = vmatprep.subr.bf16.mxu0 0
        %771 = vmatpush1.bf16.msra.mxu0 0
        %772 = vmatprep.subr.bf16.mxu0 0
        %773 = vmatpush1.bf16.msra.mxu0 0
        %774 = vmatprep.subr.bf16.mxu0 0
        %775 = vmatpush1.bf16.msra.mxu0 0
        %776 = vmatprep.subr.bf16.mxu0 0
        %777 = vmatpush1.bf16.msra.mxu0 0
        %778 = vmatprep.subr.bf16.mxu0 0
        %779 = vmatpush1.bf16.msra.mxu0 0
        %780 = vmatprep.subr.bf16.mxu0 0
        %781 = vmatpush1.bf16.msra.mxu0 0
        %782 = vmatprep.subr.bf16.mxu0 0
        %783 = vmatpush1.bf16.msra.mxu0 0
        %784 = vmatprep.subr.bf16.mxu0 0
        %785 = vmatpush1.bf16.msra.mxu0 0
        %786 = vmatprep.subr.bf16.mxu0 0
        %787 = vmatpush1.bf16.msra.mxu0 0
        %788 = vmatprep.subr.bf16.mxu0 0
        %789 = vmatpush1.bf16.msra.mxu0 0
        %790 = vmatprep.subr.bf16.mxu0 0
        %791 = vmatpush1.bf16.msra.mxu0 0
        %792 = vmatprep.subr.bf16.mxu0 0
        %793 = vmatpush1.bf16.msra.mxu0 0
        %794 = vmatprep.subr.bf16.mxu0 0
        %795 = vmatpush1.bf16.msra.mxu0 0
        %796 = vmatprep.subr.bf16.mxu0 0
        %797 = vmatpush1.bf16.msra.mxu0 0
        %798 = vmatprep.mubr.bf16.mxu0 0
        %799 = vmatmul.mubr.bf16.gmra.mrb[0].mxu0 %v758
        %v800 = vpop.f32.mrb[0].mxu0
        %v801 = vadd.f32 0.0, %v800
        %v802 = vpop.f32.mrb[0].mxu0
        %v803 = vadd.f32 0.0, %v802
        %v804 = vpop.f32.mrb[0].mxu0
        %v805 = vpop.f32.mrb[0].mxu0
        %806 = vdwg.mxu0
        %v807 = vadd.f32 %v727, %v801
        %v808 = vadd.f32 %v728, %v803
        %809 = vst [vmem:[#allocation2] sm:$0xff] %v807
        %810 = vst [vmem:[#allocation2 + $0x8] sm:$0xff] %v808
        %v811 = vld [vmem:[#allocation3 + $0x2] sm:$0xf]
        %v812 = vld [vmem:[#allocation2] sm:$0xff]
        %v813 = vld [vmem:[#allocation2 + $0x8] sm:$0xff]
        %s814 = scalar_lea.vmem %s344, 16
        %v815 = vld [vmem:[%s814] sm:$0xf]
        %v818 = vunpack.c.l.s4 1983009808
        %v819 = vunpack.c.0.s8 %v818
        %v820 = vlaneseq
        %v821 = vshrl.u32 %v820, 7
        %v822 = vsub.s32 %v819, %v821
        %v823 = vrot.slane %v811, %v822
        %v824 = vcombine.high %v823, %v823
        %v826 = vsel %vm462, %v815, 0
        %v829 = vsel %vm466, %v823, 0
        %v832 = vsel %vm466, %v824, 0
        %834 = vmatprep.subr.bf16.mxu0 %v832
        %835 = vmatpush1.bf16.msra.mxu0 %v829
        %836 = vmatprep.subr.bf16.mxu0 0
        %837 = vmatpush1.bf16.msra.mxu0 0
        %838 = vmatprep.subr.bf16.mxu0 0
        %839 = vmatpush1.bf16.msra.mxu0 0
        %840 = vmatprep.subr.bf16.mxu0 0
        %841 = vmatpush1.bf16.msra.mxu0 0
        %842 = vmatprep.subr.bf16.mxu0 0
        %843 = vmatpush1.bf16.msra.mxu0 0
        %844 = vmatprep.subr.bf16.mxu0 0
        %845 = vmatpush1.bf16.msra.mxu0 0
        %846 = vmatprep.subr.bf16.mxu0 0
        %847 = vmatpush1.bf16.msra.mxu0 0
        %848 = vmatprep.subr.bf16.mxu0 0
        %849 = vmatpush1.bf16.msra.mxu0 0
        %850 = vmatprep.subr.bf16.mxu0 0
        %851 = vmatpush1.bf16.msra.mxu0 0
        %852 = vmatprep.subr.bf16.mxu0 0
        %853 = vmatpush1.bf16.msra.mxu0 0
        %854 = vmatprep.subr.bf16.mxu0 0
        %855 = vmatpush1.bf16.msra.mxu0 0
        %856 = vmatprep.subr.bf16.mxu0 0
        %857 = vmatpush1.bf16.msra.mxu0 0
        %858 = vmatprep.subr.bf16.mxu0 0
        %859 = vmatpush1.bf16.msra.mxu0 0
        %860 = vmatprep.subr.bf16.mxu0 0
        %861 = vmatpush1.bf16.msra.mxu0 0
        %862 = vmatprep.subr.bf16.mxu0 0
        %863 = vmatpush1.bf16.msra.mxu0 0
        %864 = vmatprep.subr.bf16.mxu0 0
        %865 = vmatpush1.bf16.msra.mxu0 0
        %866 = vmatprep.mubr.bf16.mxu0 0
        %867 = vmatmul.mubr.bf16.gmra.mrb[0].mxu0 %v826
        %v868 = vpop.f32.mrb[0].mxu0
        %v869 = vadd.f32 0.0, %v868
        %v870 = vpop.f32.mrb[0].mxu0
        %v871 = vadd.f32 0.0, %v870
        %v872 = vpop.f32.mrb[0].mxu0
        %v873 = vpop.f32.mrb[0].mxu0
        %874 = vdwg.mxu0
        %v875 = vadd.f32 %v812, %v869
        %v876 = vadd.f32 %v813, %v871
        %877 = vst [vmem:[#allocation2] sm:$0xff] %v875
        %878 = vst [vmem:[#allocation2 + $0x8] sm:$0xff] %v876
        %v879 = vld [vmem:[#allocation3 + $0x2] sm:$0x3f]
        %880 = vrot.lane.b32.xlu0 %v627, 1
        %v881 = vpop.permute.xlu0 %880
        %v882 = vrot.slane %v881, 6
        %v883 = vsel %vm754, %v882, %v881
        %v885 = vmul.bf16 %v879, %v883
        %v886 = vld [vmem:[#allocation2] sm:$0xff]
        %v887 = vld [vmem:[#allocation2 + $0x8] sm:$0xff]
        %s888 = scalar_lea.vmem %s344, 20
        %v889 = vld [vmem:[%s888] sm:$0xf]
        %v891 = vcombine.high %v885, %v885
        %v893 = vunpack.c.l.s4 1983009808
        %v894 = vunpack.c.0.s8 %v893
        %v895 = vlaneseq
        %v896 = vshrl.u32 %v895, 7
        %v897 = vsub.s32 %v894, %v896
        %v898 = vrot.slane %v885, %v897
        %v900 = vunpack.c.l.s4 1983009808
        %v901 = vunpack.c.0.s8 %v900
        %v902 = vlaneseq
        %v903 = vshrl.u32 %v902, 7
        %v904 = vsub.s32 %v901, %v903
        %v905 = vrot.slane %v891, %v904
        %v906 = vcombine.high %v898, %v898
        %907 = vrot.lane.b32.xlu0 %v898, 127
        %v908 = vpop.permute.xlu0 %907
        %909 = vrot.lane.b32.xlu0 %v906, 127
        %v910 = vpop.permute.xlu0 %909
        %911 = vrot.lane.b32.xlu0 %v905, 127
        %v912 = vpop.permute.xlu0 %911
        %v913 = vsel %vm723, %v908, %v910
        %v914 = vsel %vm723, %v910, %v912
        %v916 = vsel %vm462, %v889, 0
        %v919 = vsel %vm466, %v913, 0
        %v922 = vsel %vm466, %v914, 0
        %924 = vmatprep.subr.bf16.mxu0 %v922
        %925 = vmatpush1.bf16.msra.mxu0 %v919
        %926 = vmatprep.subr.bf16.mxu0 0
        %927 = vmatpush1.bf16.msra.mxu0 0
        %928 = vmatprep.subr.bf16.mxu0 0
        %929 = vmatpush1.bf16.msra.mxu0 0
        %930 = vmatprep.subr.bf16.mxu0 0
        %931 = vmatpush1.bf16.msra.mxu0 0
        %932 = vmatprep.subr.bf16.mxu0 0
        %933 = vmatpush1.bf16.msra.mxu0 0
        %934 = vmatprep.subr.bf16.mxu0 0
        %935 = vmatpush1.bf16.msra.mxu0 0
        %936 = vmatprep.subr.bf16.mxu0 0
        %937 = vmatpush1.bf16.msra.mxu0 0
        %938 = vmatprep.subr.bf16.mxu0 0
        %939 = vmatpush1.bf16.msra.mxu0 0
        %940 = vmatprep.subr.bf16.mxu0 0
        %941 = vmatpush1.bf16.msra.mxu0 0
        %942 = vmatprep.subr.bf16.mxu0 0
        %943 = vmatpush1.bf16.msra.mxu0 0
        %944 = vmatprep.subr.bf16.mxu0 0
        %945 = vmatpush1.bf16.msra.mxu0 0
        %946 = vmatprep.subr.bf16.mxu0 0
        %947 = vmatpush1.bf16.msra.mxu0 0
        %948 = vmatprep.subr.bf16.mxu0 0
        %949 = vmatpush1.bf16.msra.mxu0 0
        %950 = vmatprep.subr.bf16.mxu0 0
        %951 = vmatpush1.bf16.msra.mxu0 0
        %952 = vmatprep.subr.bf16.mxu0 0
        %953 = vmatpush1.bf16.msra.mxu0 0
        %954 = vmatprep.subr.bf16.mxu0 0
        %955 = vmatpush1.bf16.msra.mxu0 0
        %956 = vmatprep.mubr.bf16.mxu0 0
        %957 = vmatmul.mubr.bf16.gmra.mrb[0].mxu0 %v916
        %v958 = vpop.f32.mrb[0].mxu0
        %v959 = vadd.f32 0.0, %v958
        %v960 = vpop.f32.mrb[0].mxu0
        %v961 = vadd.f32 0.0, %v960
        %v962 = vpop.f32.mrb[0].mxu0
        %v963 = vpop.f32.mrb[0].mxu0
        %964 = vdwg.mxu0
        %v965 = vadd.f32 %v886, %v959
        %v966 = vadd.f32 %v887, %v961
        %967 = vst [vmem:[#allocation2] sm:$0xff] %v965
        %968 = vst [vmem:[#allocation2 + $0x8] sm:$0xff] %v966
        %v969 = vld [vmem:[#allocation3 + $0x2] sm:$0x3f]
        %970 = vrot.lane.b32.xlu0 %v425, 15
        %v971 = vpop.permute.xlu0 %970
        %v972 = vrot.slane %v971, 6
        %v973 = vsel %vm662, %v972, %v971
        %v975 = vmul.bf16 %v969, %v973
        %v976 = vld [vmem:[#allocation2] sm:$0xff]
        %v977 = vld [vmem:[#allocation2 + $0x8] sm:$0xff]
        %s978 = scalar_lea.vmem %s344, 24
        %v979 = vld [vmem:[%s978] sm:$0xf]
        %v981 = vcombine.high %v975, %v975
        %v983 = vunpack.c.l.s4 1983009808
        %v984 = vunpack.c.0.s8 %v983
        %v985 = vlaneseq
        %v986 = vshrl.u32 %v985, 7
        %v987 = vsub.s32 %v984, %v986
        %v988 = vrot.slane %v975, %v987
        %v990 = vunpack.c.l.s4 1983009808
        %v991 = vunpack.c.0.s8 %v990
        %v992 = vlaneseq
        %v993 = vshrl.u32 %v992, 7
        %v994 = vsub.s32 %v991, %v993
        %v995 = vrot.slane %v981, %v994
        %v996 = vcombine.high %v988, %v988
        %997 = vrot.lane.b32.xlu0 %v988, 113
        %v998 = vpop.permute.xlu0 %997
        %999 = vrot.lane.b32.xlu0 %v996, 113
        %v1000 = vpop.permute.xlu0 %999
        %1001 = vrot.lane.b32.xlu0 %v995, 113
        %v1002 = vpop.permute.xlu0 %1001
        %v1003 = vsel %vm631, %v998, %v1000
        %v1004 = vsel %vm631, %v1000, %v1002
        %v1006 = vsel %vm462, %v979, 0
        %v1009 = vsel %vm466, %v1003, 0
        %v1012 = vsel %vm466, %v1004, 0
        %1014 = vmatprep.subr.bf16.mxu0 %v1012
        %1015 = vmatpush1.bf16.msra.mxu0 %v1009
        %1016 = vmatprep.subr.bf16.mxu0 0
        %1017 = vmatpush1.bf16.msra.mxu0 0
        %1018 = vmatprep.subr.bf16.mxu0 0
        %1019 = vmatpush1.bf16.msra.mxu0 0
        %1020 = vmatprep.subr.bf16.mxu0 0
        %1021 = vmatpush1.bf16.msra.mxu0 0
        %1022 = vmatprep.subr.bf16.mxu0 0
        %1023 = vmatpush1.bf16.msra.mxu0 0
        %1024 = vmatprep.subr.bf16.mxu0 0
        %1025 = vmatpush1.bf16.msra.mxu0 0
        %1026 = vmatprep.subr.bf16.mxu0 0
        %1027 = vmatpush1.bf16.msra.mxu0 0
        %1028 = vmatprep.subr.bf16.mxu0 0
        %1029 = vmatpush1.bf16.msra.mxu0 0
        %1030 = vmatprep.subr.bf16.mxu0 0
        %1031 = vmatpush1.bf16.msra.mxu0 0
        %1032 = vmatprep.subr.bf16.mxu0 0
        %1033 = vmatpush1.bf16.msra.mxu0 0
        %1034 = vmatprep.subr.bf16.mxu0 0
        %1035 = vmatpush1.bf16.msra.mxu0 0
        %1036 = vmatprep.subr.bf16.mxu0 0
        %1037 = vmatpush1.bf16.msra.mxu0 0
        %1038 = vmatprep.subr.bf16.mxu0 0
        %1039 = vmatpush1.bf16.msra.mxu0 0
        %1040 = vmatprep.subr.bf16.mxu0 0
        %1041 = vmatpush1.bf16.msra.mxu0 0
        %1042 = vmatprep.subr.bf16.mxu0 0
        %1043 = vmatpush1.bf16.msra.mxu0 0
        %1044 = vmatprep.subr.bf16.mxu0 0
        %1045 = vmatpush1.bf16.msra.mxu0 0
        %1046 = vmatprep.mubr.bf16.mxu0 0
        %1047 = vmatmul.mubr.bf16.gmra.mrb[0].mxu0 %v1006
        %v1048 = vpop.f32.mrb[0].mxu0
        %v1049 = vadd.f32 0.0, %v1048
        %v1050 = vpop.f32.mrb[0].mxu0
        %v1051 = vadd.f32 0.0, %v1050
        %v1052 = vpop.f32.mrb[0].mxu0
        %v1053 = vpop.f32.mrb[0].mxu0
        %1054 = vdwg.mxu0
        %v1055 = vadd.f32 %v976, %v1049
        %v1056 = vadd.f32 %v977, %v1051
        %1057 = vst [vmem:[#allocation2] sm:$0xff] %v1055
        %1058 = vst [vmem:[#allocation2 + $0x8] sm:$0xff] %v1056
        %v1059 = vld [vmem:[#allocation3 + $0x2] sm:$0x3f]
        %v1060 = vld [vmem:[#allocation2] sm:$0xff]
        %v1061 = vld [vmem:[#allocation2 + $0x8] sm:$0xff]
        %s1062 = scalar_lea.vmem %s344, 28
        %v1063 = vld [vmem:[%s1062] sm:$0xf]
        %v1065 = vcombine.high %v1059, %v1059
        %v1067 = vunpack.c.l.s4 1983009808
        %v1068 = vunpack.c.0.s8 %v1067
        %v1069 = vlaneseq
        %v1070 = vshrl.u32 %v1069, 7
        %v1071 = vsub.s32 %v1068, %v1070
        %v1072 = vrot.slane %v1059, %v1071
        %v1074 = vunpack.c.l.s4 1983009808
        %v1075 = vunpack.c.0.s8 %v1074
        %v1076 = vlaneseq
        %v1077 = vshrl.u32 %v1076, 7
        %v1078 = vsub.s32 %v1075, %v1077
        %v1079 = vrot.slane %v1065, %v1078
        %v1080 = vcombine.high %v1072, %v1072
        %1081 = vrot.lane.b32.xlu0 %v1072, 112
        %v1082 = vpop.permute.xlu0 %1081
        %1083 = vrot.lane.b32.xlu0 %v1080, 112
        %v1084 = vpop.permute.xlu0 %1083
        %1085 = vrot.lane.b32.xlu0 %v1079, 112
        %v1086 = vpop.permute.xlu0 %1085
        %vm1087 = vcmask 916480
        %v1088 = vsel %vm1087, %v1082, %v1084
        %v1089 = vsel %vm1087, %v1084, %v1086
        %v1091 = vsel %vm462, %v1063, 0
        %v1094 = vsel %vm466, %v1088, 0
        %v1097 = vsel %vm466, %v1089, 0
        %1099 = vmatprep.subr.bf16.mxu0 %v1097
        %1100 = vmatpush1.bf16.msra.mxu0 %v1094
        %1101 = vmatprep.subr.bf16.mxu0 0
        %1102 = vmatpush1.bf16.msra.mxu0 0
        %1103 = vmatprep.subr.bf16.mxu0 0
        %1104 = vmatpush1.bf16.msra.mxu0 0
        %1105 = vmatprep.subr.bf16.mxu0 0
        %1106 = vmatpush1.bf16.msra.mxu0 0
        %1107 = vmatprep.subr.bf16.mxu0 0
        %1108 = vmatpush1.bf16.msra.mxu0 0
        %1109 = vmatprep.subr.bf16.mxu0 0
        %1110 = vmatpush1.bf16.msra.mxu0 0
        %1111 = vmatprep.subr.bf16.mxu0 0
        %1112 = vmatpush1.bf16.msra.mxu0 0
        %1113 = vmatprep.subr.bf16.mxu0 0
        %1114 = vmatpush1.bf16.msra.mxu0 0
        %1115 = vmatprep.subr.bf16.mxu0 0
        %1116 = vmatpush1.bf16.msra.mxu0 0
        %1117 = vmatprep.subr.bf16.mxu0 0
        %1118 = vmatpush1.bf16.msra.mxu0 0
        %1119 = vmatprep.subr.bf16.mxu0 0
        %1120 = vmatpush1.bf16.msra.mxu0 0
        %1121 = vmatprep.subr.bf16.mxu0 0
        %1122 = vmatpush1.bf16.msra.mxu0 0
        %1123 = vmatprep.subr.bf16.mxu0 0
        %1124 = vmatpush1.bf16.msra.mxu0 0
        %1125 = vmatprep.subr.bf16.mxu0 0
        %1126 = vmatpush1.bf16.msra.mxu0 0
        %1127 = vmatprep.subr.bf16.mxu0 0
        %1128 = vmatpush1.bf16.msra.mxu0 0
        %1129 = vmatprep.subr.bf16.mxu0 0
        %1130 = vmatpush1.bf16.msra.mxu0 0
        %1131 = vmatprep.mubr.bf16.mxu0 0
        %1132 = vmatmul.mubr.bf16.gmra.mrb[0].mxu0 %v1091
        %v1133 = vpop.f32.mrb[0].mxu0
        %v1134 = vadd.f32 0.0, %v1133
        %v1135 = vpop.f32.mrb[0].mxu0
        %v1136 = vadd.f32 0.0, %v1135
        %v1137 = vpop.f32.mrb[0].mxu0
        %v1138 = vpop.f32.mrb[0].mxu0
        %1139 = vdwg.mxu0
        %v1140 = vadd.f32 %v1060, %v1134
        %v1141 = vadd.f32 %v1061, %v1136
        %1142 = vst [vmem:[#allocation2] sm:$0xff] %v1140
        %1143 = vst [vmem:[#allocation2 + $0x8] sm:$0xff] %v1141
        %v1144 = vld [vmem:[#allocation3 + $0x2] sm:$0x3f]
        %1145 = vrot.lane.b32.xlu0 %v627, 17
        %v1146 = vpop.permute.xlu0 %1145
        %v1147 = vrot.slane %v1146, 6
        %v1148 = vsel %vm459, %v1147, %v1146
        %v1150 = vmul.bf16 %v1144, %v1148
        %v1151 = vld [vmem:[#allocation2] sm:$0xff]
        %v1152 = vld [vmem:[#allocation2 + $0x8] sm:$0xff]
        %s1153 = scalar_lea.vmem %s344, 32
        %v1154 = vld [vmem:[%s1153] sm:$0xf]
        %v1156 = vcombine.high %v1150, %v1150
        %v1158 = vunpack.c.l.s4 1983009808
        %v1159 = vunpack.c.0.s8 %v1158
        %v1160 = vlaneseq
        %v1161 = vshrl.u32 %v1160, 7
        %v1162 = vsub.s32 %v1159, %v1161
        %v1163 = vrot.slane %v1150, %v1162
        %v1165 = vunpack.c.l.s4 1983009808
        %v1166 = vunpack.c.0.s8 %v1165
        %v1167 = vlaneseq
        %v1168 = vshrl.u32 %v1167, 7
        %v1169 = vsub.s32 %v1166, %v1168
        %v1170 = vrot.slane %v1156, %v1169
        %v1171 = vcombine.high %v1163, %v1163
        %1172 = vrot.lane.b32.xlu0 %v1163, 111
        %v1173 = vpop.permute.xlu0 %1172
        %1174 = vrot.lane.b32.xlu0 %v1171, 111
        %v1175 = vpop.permute.xlu0 %1174
        %1176 = vrot.lane.b32.xlu0 %v1170, 111
        %v1177 = vpop.permute.xlu0 %1176
        %v1178 = vsel %vm429, %v1173, %v1175
        %v1179 = vsel %vm429, %v1175, %v1177
        %v1181 = vsel %vm462, %v1154, 0
        %v1184 = vsel %vm466, %v1178, 0
        %v1187 = vsel %vm466, %v1179, 0
        %1189 = vmatprep.subr.bf16.mxu0 %v1187
        %1190 = vmatpush1.bf16.msra.mxu0 %v1184
        %1191 = vmatprep.subr.bf16.mxu0 0
        %1192 = vmatpush1.bf16.msra.mxu0 0
        %1193 = vmatprep.subr.bf16.mxu0 0
        %1194 = vmatpush1.bf16.msra.mxu0 0
        %1195 = vmatprep.subr.bf16.mxu0 0
        %1196 = vmatpush1.bf16.msra.mxu0 0
        %1197 = vmatprep.subr.bf16.mxu0 0
        %1198 = vmatpush1.bf16.msra.mxu0 0
        %1199 = vmatprep.subr.bf16.mxu0 0
        %1200 = vmatpush1.bf16.msra.mxu0 0
        %1201 = vmatprep.subr.bf16.mxu0 0
        %1202 = vmatpush1.bf16.msra.mxu0 0
        %1203 = vmatprep.subr.bf16.mxu0 0
        %1204 = vmatpush1.bf16.msra.mxu0 0
        %1205 = vmatprep.subr.bf16.mxu0 0
        %1206 = vmatpush1.bf16.msra.mxu0 0
        %1207 = vmatprep.subr.bf16.mxu0 0
        %1208 = vmatpush1.bf16.msra.mxu0 0
        %1209 = vmatprep.subr.bf16.mxu0 0
        %1210 = vmatpush1.bf16.msra.mxu0 0
        %1211 = vmatprep.subr.bf16.mxu0 0
        %1212 = vmatpush1.bf16.msra.mxu0 0
        %1213 = vmatprep.subr.bf16.mxu0 0
        %1214 = vmatpush1.bf16.msra.mxu0 0
        %1215 = vmatprep.subr.bf16.mxu0 0
        %1216 = vmatpush1.bf16.msra.mxu0 0
        %1217 = vmatprep.subr.bf16.mxu0 0
        %1218 = vmatpush1.bf16.msra.mxu0 0
        %1219 = vmatprep.subr.bf16.mxu0 0
        %1220 = vmatpush1.bf16.msra.mxu0 0
        %1221 = vmatprep.mubr.bf16.mxu0 0
        %1222 = vmatmul.mubr.bf16.gmra.mrb[0].mxu0 %v1181
        %v1223 = vpop.f32.mrb[0].mxu0
        %v1224 = vadd.f32 0.0, %v1223
        %v1225 = vpop.f32.mrb[0].mxu0
        %v1226 = vadd.f32 0.0, %v1225
        %v1227 = vpop.f32.mrb[0].mxu0
        %v1228 = vpop.f32.mrb[0].mxu0
        %1229 = vdwg.mxu0
        %v1230 = vadd.f32 %v1151, %v1224
        %v1231 = vadd.f32 %v1152, %v1226
        %1232 = vst [vmem:[#allocation2] sm:$0xff] %v1230
        %1233 = vst [vmem:[#allocation2 + $0x8] sm:$0xff] %v1231
        %1234 = vst [vmem:[#allocation4] sm:$0x3] 0
        %1235 = vst [vmem:[#allocation4 + $0x6] sm:$0x3] 0
        %v1236 = vld [vmem:[%s339] sm:$0xff]
        %v1238 = vcombine.high %v1236, %v1236
        %v1240 = vpack.c.bf16 %v1236, %v1236
        %v1241 = vpack.c.bf16 %v1238, %v1238
        %v1244 = vcombine.low %v1240, %v1241
        %v1246 = vunpack.c.l.s4 1983009808
        %v1247 = vunpack.c.0.s8 %v1246
        %v1248 = vlaneseq
        %v1249 = vshrl.u32 %v1248, 7
        %v1250 = vsub.s32 %v1247, %v1249
        %v1251 = vrot.slane %v1244, %v1250
        %1253 = vst [vmem:[#allocation4 + $0x2] sm:$0xf] %v1251
        %v1254 = vld [vmem:[#allocation4] sm:$0x3f]
        %v1255 = vmul.bf16 %v1254, %v430
        %v1256 = vld [vmem:[#allocation2] sm:$0xff]
        %v1257 = vld [vmem:[#allocation2 + $0x8] sm:$0xff]
        %v1258 = vld [vmem:[%s349] sm:$0xf]
        %v1260 = vcombine.high %v1255, %v1255
        %v1262 = vunpack.c.l.s4 1983009808
        %v1263 = vunpack.c.0.s8 %v1262
        %v1264 = vlaneseq
        %v1265 = vshrl.u32 %v1264, 7
        %v1266 = vsub.s32 %v1263, %v1265
        %v1267 = vrot.slane %v1255, %v1266
        %v1269 = vunpack.c.l.s4 1983009808
        %v1270 = vunpack.c.0.s8 %v1269
        %v1271 = vlaneseq
        %v1272 = vshrl.u32 %v1271, 7
        %v1273 = vsub.s32 %v1270, %v1272
        %v1274 = vrot.slane %v1260, %v1273
        %v1275 = vcombine.high %v1267, %v1267
        %1276 = vrot.lane.b32.xlu0 %v1267, 17
        %v1277 = vpop.permute.xlu0 %1276
        %1278 = vrot.lane.b32.xlu0 %v1275, 17
        %v1279 = vpop.permute.xlu0 %1278
        %1280 = vrot.lane.b32.xlu0 %v1274, 17
        %v1281 = vpop.permute.xlu0 %1280
        %v1282 = vsel %vm459, %v1277, %v1279
        %v1283 = vsel %vm459, %v1279, %v1281
        %v1285 = vsel %vm462, %v1258, 0
        %v1288 = vsel %vm466, %v1282, 0
        %v1291 = vsel %vm466, %v1283, 0
        %1293 = vmatprep.subr.bf16.mxu0 %v1291
        %1294 = vmatpush1.bf16.msra.mxu0 %v1288
        %1295 = vmatprep.subr.bf16.mxu0 0
        %1296 = vmatpush1.bf16.msra.mxu0 0
        %1297 = vmatprep.subr.bf16.mxu0 0
        %1298 = vmatpush1.bf16.msra.mxu0 0
        %1299 = vmatprep.subr.bf16.mxu0 0
        %1300 = vmatpush1.bf16.msra.mxu0 0
        %1301 = vmatprep.subr.bf16.mxu0 0
        %1302 = vmatpush1.bf16.msra.mxu0 0
        %1303 = vmatprep.subr.bf16.mxu0 0
        %1304 = vmatpush1.bf16.msra.mxu0 0
        %1305 = vmatprep.subr.bf16.mxu0 0
        %1306 = vmatpush1.bf16.msra.mxu0 0
        %1307 = vmatprep.subr.bf16.mxu0 0
        %1308 = vmatpush1.bf16.msra.mxu0 0
        %1309 = vmatprep.subr.bf16.mxu0 0
        %1310 = vmatpush1.bf16.msra.mxu0 0
        %1311 = vmatprep.subr.bf16.mxu0 0
        %1312 = vmatpush1.bf16.msra.mxu0 0
        %1313 = vmatprep.subr.bf16.mxu0 0
        %1314 = vmatpush1.bf16.msra.mxu0 0
        %1315 = vmatprep.subr.bf16.mxu0 0
        %1316 = vmatpush1.bf16.msra.mxu0 0
        %1317 = vmatprep.subr.bf16.mxu0 0
        %1318 = vmatpush1.bf16.msra.mxu0 0
        %1319 = vmatprep.subr.bf16.mxu0 0
        %1320 = vmatpush1.bf16.msra.mxu0 0
        %1321 = vmatprep.subr.bf16.mxu0 0
        %1322 = vmatpush1.bf16.msra.mxu0 0
        %1323 = vmatprep.subr.bf16.mxu0 0
        %1324 = vmatpush1.bf16.msra.mxu0 0
        %1325 = vmatprep.mubr.bf16.mxu0 0
        %1326 = vmatmul.mubr.bf16.gmra.mrb[0].mxu0 %v1285
        %v1327 = vpop.f32.mrb[0].mxu0
        %v1328 = vadd.f32 0.0, %v1327
        %v1329 = vpop.f32.mrb[0].mxu0
        %v1330 = vadd.f32 0.0, %v1329
        %v1331 = vpop.f32.mrb[0].mxu0
        %v1332 = vpop.f32.mrb[0].mxu0
        %1333 = vdwg.mxu0
        %v1334 = vadd.f32 %v1256, %v1328
        %v1335 = vadd.f32 %v1257, %v1330
        %1336 = vst [vmem:[#allocation2] sm:$0xff] %v1334
        %1337 = vst [vmem:[#allocation2 + $0x8] sm:$0xff] %v1335
        %v1338 = vld [vmem:[#allocation4] sm:$0x3f]
        %v1339 = vld [vmem:[#allocation2] sm:$0xff]
        %v1340 = vld [vmem:[#allocation2 + $0x8] sm:$0xff]
        %s1341 = scalar_lea.vmem %s349, 4
        %v1342 = vld [vmem:[%s1341] sm:$0xf]
        %v1344 = vcombine.high %v1338, %v1338
        %v1346 = vunpack.c.l.s4 1983009808
        %v1347 = vunpack.c.0.s8 %v1346
        %v1348 = vlaneseq
        %v1349 = vshrl.u32 %v1348, 7
        %v1350 = vsub.s32 %v1347, %v1349
        %v1351 = vrot.slane %v1338, %v1350
        %v1353 = vunpack.c.l.s4 1983009808
        %v1354 = vunpack.c.0.s8 %v1353
        %v1355 = vlaneseq
        %v1356 = vshrl.u32 %v1355, 7
        %v1357 = vsub.s32 %v1354, %v1356
        %v1358 = vrot.slane %v1344, %v1357
        %v1359 = vcombine.high %v1351, %v1351
        %1360 = vrot.lane.b32.xlu0 %v1351, 16
        %v1361 = vpop.permute.xlu0 %1360
        %1362 = vrot.lane.b32.xlu0 %v1359, 16
        %v1363 = vpop.permute.xlu0 %1362
        %1364 = vrot.lane.b32.xlu0 %v1358, 16
        %v1365 = vpop.permute.xlu0 %1364
        %v1366 = vsel %vm546, %v1361, %v1363
        %v1367 = vsel %vm546, %v1363, %v1365
        %v1369 = vsel %vm462, %v1342, 0
        %v1372 = vsel %vm466, %v1366, 0
        %v1375 = vsel %vm466, %v1367, 0
        %1377 = vmatprep.subr.bf16.mxu0 %v1375
        %1378 = vmatpush1.bf16.msra.mxu0 %v1372
        %1379 = vmatprep.subr.bf16.mxu0 0
        %1380 = vmatpush1.bf16.msra.mxu0 0
        %1381 = vmatprep.subr.bf16.mxu0 0
        %1382 = vmatpush1.bf16.msra.mxu0 0
        %1383 = vmatprep.subr.bf16.mxu0 0
        %1384 = vmatpush1.bf16.msra.mxu0 0
        %1385 = vmatprep.subr.bf16.mxu0 0
        %1386 = vmatpush1.bf16.msra.mxu0 0
        %1387 = vmatprep.subr.bf16.mxu0 0
        %1388 = vmatpush1.bf16.msra.mxu0 0
        %1389 = vmatprep.subr.bf16.mxu0 0
        %1390 = vmatpush1.bf16.msra.mxu0 0
        %1391 = vmatprep.subr.bf16.mxu0 0
        %1392 = vmatpush1.bf16.msra.mxu0 0
        %1393 = vmatprep.subr.bf16.mxu0 0
        %1394 = vmatpush1.bf16.msra.mxu0 0
        %1395 = vmatprep.subr.bf16.mxu0 0
        %1396 = vmatpush1.bf16.msra.mxu0 0
        %1397 = vmatprep.subr.bf16.mxu0 0
        %1398 = vmatpush1.bf16.msra.mxu0 0
        %1399 = vmatprep.subr.bf16.mxu0 0
        %1400 = vmatpush1.bf16.msra.mxu0 0
        %1401 = vmatprep.subr.bf16.mxu0 0
        %1402 = vmatpush1.bf16.msra.mxu0 0
        %1403 = vmatprep.subr.bf16.mxu0 0
        %1404 = vmatpush1.bf16.msra.mxu0 0
        %1405 = vmatprep.subr.bf16.mxu0 0
        %1406 = vmatpush1.bf16.msra.mxu0 0
        %1407 = vmatprep.subr.bf16.mxu0 0
        %1408 = vmatpush1.bf16.msra.mxu0 0
        %1409 = vmatprep.mubr.bf16.mxu0 0
        %1410 = vmatmul.mubr.bf16.gmra.mrb[0].mxu0 %v1369
        %v1411 = vpop.f32.mrb[0].mxu0
        %v1412 = vadd.f32 0.0, %v1411
        %v1413 = vpop.f32.mrb[0].mxu0
        %v1414 = vadd.f32 0.0, %v1413
        %v1415 = vpop.f32.mrb[0].mxu0
        %v1416 = vpop.f32.mrb[0].mxu0
        %1417 = vdwg.mxu0
        %v1418 = vadd.f32 %v1339, %v1412
        %v1419 = vadd.f32 %v1340, %v1414
        %1420 = vst [vmem:[#allocation2] sm:$0xff] %v1418
        %1421 = vst [vmem:[#allocation2 + $0x8] sm:$0xff] %v1419
        %v1422 = vld [vmem:[#allocation4] sm:$0x3f]
        %v1423 = vmul.bf16 %v1422, %v632
        %v1424 = vld [vmem:[#allocation2] sm:$0xff]
        %v1425 = vld [vmem:[#allocation2 + $0x8] sm:$0xff]
        %s1426 = scalar_lea.vmem %s349, 8
        %v1427 = vld [vmem:[%s1426] sm:$0xf]
        %v1429 = vcombine.high %v1423, %v1423
        %v1431 = vunpack.c.l.s4 1983009808
        %v1432 = vunpack.c.0.s8 %v1431
        %v1433 = vlaneseq
        %v1434 = vshrl.u32 %v1433, 7
        %v1435 = vsub.s32 %v1432, %v1434
        %v1436 = vrot.slane %v1423, %v1435
        %v1438 = vunpack.c.l.s4 1983009808
        %v1439 = vunpack.c.0.s8 %v1438
        %v1440 = vlaneseq
        %v1441 = vshrl.u32 %v1440, 7
        %v1442 = vsub.s32 %v1439, %v1441
        %v1443 = vrot.slane %v1429, %v1442
        %v1444 = vcombine.high %v1436, %v1436
        %1445 = vrot.lane.b32.xlu0 %v1436, 15
        %v1446 = vpop.permute.xlu0 %1445
        %1447 = vrot.lane.b32.xlu0 %v1444, 15
        %v1448 = vpop.permute.xlu0 %1447
        %1449 = vrot.lane.b32.xlu0 %v1443, 15
        %v1450 = vpop.permute.xlu0 %1449
        %v1451 = vsel %vm662, %v1446, %v1448
        %v1452 = vsel %vm662, %v1448, %v1450
        %v1454 = vsel %vm462, %v1427, 0
        %v1457 = vsel %vm466, %v1451, 0
        %v1460 = vsel %vm466, %v1452, 0
        %1462 = vmatprep.subr.bf16.mxu0 %v1460
        %1463 = vmatpush1.bf16.msra.mxu0 %v1457
        %1464 = vmatprep.subr.bf16.mxu0 0
        %1465 = vmatpush1.bf16.msra.mxu0 0
        %1466 = vmatprep.subr.bf16.mxu0 0
        %1467 = vmatpush1.bf16.msra.mxu0 0
        %1468 = vmatprep.subr.bf16.mxu0 0
        %1469 = vmatpush1.bf16.msra.mxu0 0
        %1470 = vmatprep.subr.bf16.mxu0 0
        %1471 = vmatpush1.bf16.msra.mxu0 0
        %1472 = vmatprep.subr.bf16.mxu0 0
        %1473 = vmatpush1.bf16.msra.mxu0 0
        %1474 = vmatprep.subr.bf16.mxu0 0
        %1475 = vmatpush1.bf16.msra.mxu0 0
        %1476 = vmatprep.subr.bf16.mxu0 0
        %1477 = vmatpush1.bf16.msra.mxu0 0
        %1478 = vmatprep.subr.bf16.mxu0 0
        %1479 = vmatpush1.bf16.msra.mxu0 0
        %1480 = vmatprep.subr.bf16.mxu0 0
        %1481 = vmatpush1.bf16.msra.mxu0 0
        %1482 = vmatprep.subr.bf16.mxu0 0
        %1483 = vmatpush1.bf16.msra.mxu0 0
        %1484 = vmatprep.subr.bf16.mxu0 0
        %1485 = vmatpush1.bf16.msra.mxu0 0
        %1486 = vmatprep.subr.bf16.mxu0 0
        %1487 = vmatpush1.bf16.msra.mxu0 0
        %1488 = vmatprep.subr.bf16.mxu0 0
        %1489 = vmatpush1.bf16.msra.mxu0 0
        %1490 = vmatprep.subr.bf16.mxu0 0
        %1491 = vmatpush1.bf16.msra.mxu0 0
        %1492 = vmatprep.subr.bf16.mxu0 0
        %1493 = vmatpush1.bf16.msra.mxu0 0
        %1494 = vmatprep.mubr.bf16.mxu0 0
        %1495 = vmatmul.mubr.bf16.gmra.mrb[0].mxu0 %v1454
        %v1496 = vpop.f32.mrb[0].mxu0
        %v1497 = vadd.f32 0.0, %v1496
        %v1498 = vpop.f32.mrb[0].mxu0
        %v1499 = vadd.f32 0.0, %v1498
        %v1500 = vpop.f32.mrb[0].mxu0
        %v1501 = vpop.f32.mrb[0].mxu0
        %1502 = vdwg.mxu0
        %v1503 = vadd.f32 %v1424, %v1497
        %v1504 = vadd.f32 %v1425, %v1499
        %1505 = vst [vmem:[#allocation2] sm:$0xff] %v1503
        %1506 = vst [vmem:[#allocation2 + $0x8] sm:$0xff] %v1504
        %v1507 = vld [vmem:[#allocation4] sm:$0x3f]
        %v1508 = vmul.bf16 %v1507, %v724
        %v1509 = vld [vmem:[#allocation2] sm:$0xff]
        %v1510 = vld [vmem:[#allocation2 + $0x8] sm:$0xff]
        %s1511 = scalar_lea.vmem %s349, 12
        %v1512 = vld [vmem:[%s1511] sm:$0xf]
        %v1514 = vcombine.high %v1508, %v1508
        %v1516 = vunpack.c.l.s4 1983009808
        %v1517 = vunpack.c.0.s8 %v1516
        %v1518 = vlaneseq
        %v1519 = vshrl.u32 %v1518, 7
        %v1520 = vsub.s32 %v1517, %v1519
        %v1521 = vrot.slane %v1508, %v1520
        %v1523 = vunpack.c.l.s4 1983009808
        %v1524 = vunpack.c.0.s8 %v1523
        %v1525 = vlaneseq
        %v1526 = vshrl.u32 %v1525, 7
        %v1527 = vsub.s32 %v1524, %v1526
        %v1528 = vrot.slane %v1514, %v1527
        %v1529 = vcombine.high %v1521, %v1521
        %1530 = vrot.lane.b32.xlu0 %v1521, 1
        %v1531 = vpop.permute.xlu0 %1530
        %1532 = vrot.lane.b32.xlu0 %v1529, 1
        %v1533 = vpop.permute.xlu0 %1532
        %1534 = vrot.lane.b32.xlu0 %v1528, 1
        %v1535 = vpop.permute.xlu0 %1534
        %v1536 = vsel %vm754, %v1531, %v1533
        %v1537 = vsel %vm754, %v1533, %v1535
        %v1539 = vsel %vm462, %v1512, 0
        %v1542 = vsel %vm466, %v1536, 0
        %v1545 = vsel %vm466, %v1537, 0
        %1547 = vmatprep.subr.bf16.mxu0 %v1545
        %1548 = vmatpush1.bf16.msra.mxu0 %v1542
        %1549 = vmatprep.subr.bf16.mxu0 0
        %1550 = vmatpush1.bf16.msra.mxu0 0
        %1551 = vmatprep.subr.bf16.mxu0 0
        %1552 = vmatpush1.bf16.msra.mxu0 0
        %1553 = vmatprep.subr.bf16.mxu0 0
        %1554 = vmatpush1.bf16.msra.mxu0 0
        %1555 = vmatprep.subr.bf16.mxu0 0
        %1556 = vmatpush1.bf16.msra.mxu0 0
        %1557 = vmatprep.subr.bf16.mxu0 0
        %1558 = vmatpush1.bf16.msra.mxu0 0
        %1559 = vmatprep.subr.bf16.mxu0 0
        %1560 = vmatpush1.bf16.msra.mxu0 0
        %1561 = vmatprep.subr.bf16.mxu0 0
        %1562 = vmatpush1.bf16.msra.mxu0 0
        %1563 = vmatprep.subr.bf16.mxu0 0
        %1564 = vmatpush1.bf16.msra.mxu0 0
        %1565 = vmatprep.subr.bf16.mxu0 0
        %1566 = vmatpush1.bf16.msra.mxu0 0
        %1567 = vmatprep.subr.bf16.mxu0 0
        %1568 = vmatpush1.bf16.msra.mxu0 0
        %1569 = vmatprep.subr.bf16.mxu0 0
        %1570 = vmatpush1.bf16.msra.mxu0 0
        %1571 = vmatprep.subr.bf16.mxu0 0
        %1572 = vmatpush1.bf16.msra.mxu0 0
        %1573 = vmatprep.subr.bf16.mxu0 0
        %1574 = vmatpush1.bf16.msra.mxu0 0
        %1575 = vmatprep.subr.bf16.mxu0 0
        %1576 = vmatpush1.bf16.msra.mxu0 0
        %1577 = vmatprep.subr.bf16.mxu0 0
        %1578 = vmatpush1.bf16.msra.mxu0 0
        %1579 = vmatprep.mubr.bf16.mxu0 0
        %1580 = vmatmul.mubr.bf16.gmra.mrb[0].mxu0 %v1539
        %v1581 = vpop.f32.mrb[0].mxu0
        %v1582 = vadd.f32 0.0, %v1581
        %v1583 = vpop.f32.mrb[0].mxu0
        %v1584 = vadd.f32 0.0, %v1583
        %v1585 = vpop.f32.mrb[0].mxu0
        %v1586 = vpop.f32.mrb[0].mxu0
        %1587 = vdwg.mxu0
        %v1588 = vadd.f32 %v1509, %v1582
        %v1589 = vadd.f32 %v1510, %v1584
        %1590 = vst [vmem:[#allocation2] sm:$0xff] %v1588
        %1591 = vst [vmem:[#allocation2 + $0x8] sm:$0xff] %v1589
        %v1592 = vld [vmem:[#allocation4 + $0x2] sm:$0xf]
        %v1593 = vld [vmem:[#allocation2] sm:$0xff]
        %v1594 = vld [vmem:[#allocation2 + $0x8] sm:$0xff]
        %s1595 = scalar_lea.vmem %s349, 16
        %v1596 = vld [vmem:[%s1595] sm:$0xf]
        %v1599 = vunpack.c.l.s4 1983009808
        %v1600 = vunpack.c.0.s8 %v1599
        %v1601 = vlaneseq
        %v1602 = vshrl.u32 %v1601, 7
        %v1603 = vsub.s32 %v1600, %v1602
        %v1604 = vrot.slane %v1592, %v1603
        %v1605 = vcombine.high %v1604, %v1604
        %v1607 = vsel %vm462, %v1596, 0
        %v1610 = vsel %vm466, %v1604, 0
        %v1613 = vsel %vm466, %v1605, 0
        %1615 = vmatprep.subr.bf16.mxu0 %v1613
        %1616 = vmatpush1.bf16.msra.mxu0 %v1610
        %1617 = vmatprep.subr.bf16.mxu0 0
        %1618 = vmatpush1.bf16.msra.mxu0 0
        %1619 = vmatprep.subr.bf16.mxu0 0
        %1620 = vmatpush1.bf16.msra.mxu0 0
        %1621 = vmatprep.subr.bf16.mxu0 0
        %1622 = vmatpush1.bf16.msra.mxu0 0
        %1623 = vmatprep.subr.bf16.mxu0 0
        %1624 = vmatpush1.bf16.msra.mxu0 0
        %1625 = vmatprep.subr.bf16.mxu0 0
        %1626 = vmatpush1.bf16.msra.mxu0 0
        %1627 = vmatprep.subr.bf16.mxu0 0
        %1628 = vmatpush1.bf16.msra.mxu0 0
        %1629 = vmatprep.subr.bf16.mxu0 0
        %1630 = vmatpush1.bf16.msra.mxu0 0
        %1631 = vmatprep.subr.bf16.mxu0 0
        %1632 = vmatpush1.bf16.msra.mxu0 0
        %1633 = vmatprep.subr.bf16.mxu0 0
        %1634 = vmatpush1.bf16.msra.mxu0 0
        %1635 = vmatprep.subr.bf16.mxu0 0
        %1636 = vmatpush1.bf16.msra.mxu0 0
        %1637 = vmatprep.subr.bf16.mxu0 0
        %1638 = vmatpush1.bf16.msra.mxu0 0
        %1639 = vmatprep.subr.bf16.mxu0 0
        %1640 = vmatpush1.bf16.msra.mxu0 0
        %1641 = vmatprep.subr.bf16.mxu0 0
        %1642 = vmatpush1.bf16.msra.mxu0 0
        %1643 = vmatprep.subr.bf16.mxu0 0
        %1644 = vmatpush1.bf16.msra.mxu0 0
        %1645 = vmatprep.subr.bf16.mxu0 0
        %1646 = vmatpush1.bf16.msra.mxu0 0
        %1647 = vmatprep.mubr.bf16.mxu0 0
        %1648 = vmatmul.mubr.bf16.gmra.mrb[0].mxu0 %v1607
        %v1649 = vpop.f32.mrb[0].mxu0
        %v1650 = vadd.f32 0.0, %v1649
        %v1651 = vpop.f32.mrb[0].mxu0
        %v1652 = vadd.f32 0.0, %v1651
        %v1653 = vpop.f32.mrb[0].mxu0
        %v1654 = vpop.f32.mrb[0].mxu0
        %1655 = vdwg.mxu0
        %v1656 = vadd.f32 %v1593, %v1650
        %v1657 = vadd.f32 %v1594, %v1652
        %1658 = vst [vmem:[#allocation2] sm:$0xff] %v1656
        %1659 = vst [vmem:[#allocation2 + $0x8] sm:$0xff] %v1657
        %v1660 = vld [vmem:[#allocation4 + $0x2] sm:$0x3f]
        %v1661 = vmul.bf16 %v1660, %v883
        %v1662 = vld [vmem:[#allocation2] sm:$0xff]
        %v1663 = vld [vmem:[#allocation2 + $0x8] sm:$0xff]
        %s1664 = scalar_lea.vmem %s349, 20
        %v1665 = vld [vmem:[%s1664] sm:$0xf]
        %v1667 = vcombine.high %v1661, %v1661
        %v1669 = vunpack.c.l.s4 1983009808
        %v1670 = vunpack.c.0.s8 %v1669
        %v1671 = vlaneseq
        %v1672 = vshrl.u32 %v1671, 7
        %v1673 = vsub.s32 %v1670, %v1672
        %v1674 = vrot.slane %v1661, %v1673
        %v1676 = vunpack.c.l.s4 1983009808
        %v1677 = vunpack.c.0.s8 %v1676
        %v1678 = vlaneseq
        %v1679 = vshrl.u32 %v1678, 7
        %v1680 = vsub.s32 %v1677, %v1679
        %v1681 = vrot.slane %v1667, %v1680
        %v1682 = vcombine.high %v1674, %v1674
        %1683 = vrot.lane.b32.xlu0 %v1674, 127
        %v1684 = vpop.permute.xlu0 %1683
        %1685 = vrot.lane.b32.xlu0 %v1682, 127
        %v1686 = vpop.permute.xlu0 %1685
        %1687 = vrot.lane.b32.xlu0 %v1681, 127
        %v1688 = vpop.permute.xlu0 %1687
        %v1689 = vsel %vm723, %v1684, %v1686
        %v1690 = vsel %vm723, %v1686, %v1688
        %v1692 = vsel %vm462, %v1665, 0
        %v1695 = vsel %vm466, %v1689, 0
        %v1698 = vsel %vm466, %v1690, 0
        %1700 = vmatprep.subr.bf16.mxu0 %v1698
        %1701 = vmatpush1.bf16.msra.mxu0 %v1695
        %1702 = vmatprep.subr.bf16.mxu0 0
        %1703 = vmatpush1.bf16.msra.mxu0 0
        %1704 = vmatprep.subr.bf16.mxu0 0
        %1705 = vmatpush1.bf16.msra.mxu0 0
        %1706 = vmatprep.subr.bf16.mxu0 0
        %1707 = vmatpush1.bf16.msra.mxu0 0
        %1708 = vmatprep.subr.bf16.mxu0 0
        %1709 = vmatpush1.bf16.msra.mxu0 0
        %1710 = vmatprep.subr.bf16.mxu0 0
        %1711 = vmatpush1.bf16.msra.mxu0 0
        %1712 = vmatprep.subr.bf16.mxu0 0
        %1713 = vmatpush1.bf16.msra.mxu0 0
        %1714 = vmatprep.subr.bf16.mxu0 0
        %1715 = vmatpush1.bf16.msra.mxu0 0
        %1716 = vmatprep.subr.bf16.mxu0 0
        %1717 = vmatpush1.bf16.msra.mxu0 0
        %1718 = vmatprep.subr.bf16.mxu0 0
        %1719 = vmatpush1.bf16.msra.mxu0 0
        %1720 = vmatprep.subr.bf16.mxu0 0
        %1721 = vmatpush1.bf16.msra.mxu0 0
        %1722 = vmatprep.subr.bf16.mxu0 0
        %1723 = vmatpush1.bf16.msra.mxu0 0
        %1724 = vmatprep.subr.bf16.mxu0 0
        %1725 = vmatpush1.bf16.msra.mxu0 0
        %1726 = vmatprep.subr.bf16.mxu0 0
        %1727 = vmatpush1.bf16.msra.mxu0 0
        %1728 = vmatprep.subr.bf16.mxu0 0
        %1729 = vmatpush1.bf16.msra.mxu0 0
        %1730 = vmatprep.subr.bf16.mxu0 0
        %1731 = vmatpush1.bf16.msra.mxu0 0
        %1732 = vmatprep.mubr.bf16.mxu0 0
        %1733 = vmatmul.mubr.bf16.gmra.mrb[0].mxu0 %v1692
        %v1734 = vpop.f32.mrb[0].mxu0
        %v1735 = vadd.f32 0.0, %v1734
        %v1736 = vpop.f32.mrb[0].mxu0
        %v1737 = vadd.f32 0.0, %v1736
        %v1738 = vpop.f32.mrb[0].mxu0
        %v1739 = vpop.f32.mrb[0].mxu0
        %1740 = vdwg.mxu0
        %v1741 = vadd.f32 %v1662, %v1735
        %v1742 = vadd.f32 %v1663, %v1737
        %1743 = vst [vmem:[#allocation2] sm:$0xff] %v1741
        %1744 = vst [vmem:[#allocation2 + $0x8] sm:$0xff] %v1742
        %v1745 = vld [vmem:[#allocation4 + $0x2] sm:$0x3f]
        %v1746 = vmul.bf16 %v1745, %v973
        %v1747 = vld [vmem:[#allocation2] sm:$0xff]
        %v1748 = vld [vmem:[#allocation2 + $0x8] sm:$0xff]
        %s1749 = scalar_lea.vmem %s349, 24
        %v1750 = vld [vmem:[%s1749] sm:$0xf]
        %v1752 = vcombine.high %v1746, %v1746
        %v1754 = vunpack.c.l.s4 1983009808
        %v1755 = vunpack.c.0.s8 %v1754
        %v1756 = vlaneseq
        %v1757 = vshrl.u32 %v1756, 7
        %v1758 = vsub.s32 %v1755, %v1757
        %v1759 = vrot.slane %v1746, %v1758
        %v1761 = vunpack.c.l.s4 1983009808
        %v1762 = vunpack.c.0.s8 %v1761
        %v1763 = vlaneseq
        %v1764 = vshrl.u32 %v1763, 7
        %v1765 = vsub.s32 %v1762, %v1764
        %v1766 = vrot.slane %v1752, %v1765
        %v1767 = vcombine.high %v1759, %v1759
        %1768 = vrot.lane.b32.xlu0 %v1759, 113
        %v1769 = vpop.permute.xlu0 %1768
        %1770 = vrot.lane.b32.xlu0 %v1767, 113
        %v1771 = vpop.permute.xlu0 %1770
        %1772 = vrot.lane.b32.xlu0 %v1766, 113
        %v1773 = vpop.permute.xlu0 %1772
        %v1774 = vsel %vm631, %v1769, %v1771
        %v1775 = vsel %vm631, %v1771, %v1773
        %v1777 = vsel %vm462, %v1750, 0
        %v1780 = vsel %vm466, %v1774, 0
        %v1783 = vsel %vm466, %v1775, 0
        %1785 = vmatprep.subr.bf16.mxu0 %v1783
        %1786 = vmatpush1.bf16.msra.mxu0 %v1780
        %1787 = vmatprep.subr.bf16.mxu0 0
        %1788 = vmatpush1.bf16.msra.mxu0 0
        %1789 = vmatprep.subr.bf16.mxu0 0
        %1790 = vmatpush1.bf16.msra.mxu0 0
        %1791 = vmatprep.subr.bf16.mxu0 0
        %1792 = vmatpush1.bf16.msra.mxu0 0
        %1793 = vmatprep.subr.bf16.mxu0 0
        %1794 = vmatpush1.bf16.msra.mxu0 0
        %1795 = vmatprep.subr.bf16.mxu0 0
        %1796 = vmatpush1.bf16.msra.mxu0 0
        %1797 = vmatprep.subr.bf16.mxu0 0
        %1798 = vmatpush1.bf16.msra.mxu0 0
        %1799 = vmatprep.subr.bf16.mxu0 0
        %1800 = vmatpush1.bf16.msra.mxu0 0
        %1801 = vmatprep.subr.bf16.mxu0 0
        %1802 = vmatpush1.bf16.msra.mxu0 0
        %1803 = vmatprep.subr.bf16.mxu0 0
        %1804 = vmatpush1.bf16.msra.mxu0 0
        %1805 = vmatprep.subr.bf16.mxu0 0
        %1806 = vmatpush1.bf16.msra.mxu0 0
        %1807 = vmatprep.subr.bf16.mxu0 0
        %1808 = vmatpush1.bf16.msra.mxu0 0
        %1809 = vmatprep.subr.bf16.mxu0 0
        %1810 = vmatpush1.bf16.msra.mxu0 0
        %1811 = vmatprep.subr.bf16.mxu0 0
        %1812 = vmatpush1.bf16.msra.mxu0 0
        %1813 = vmatprep.subr.bf16.mxu0 0
        %1814 = vmatpush1.bf16.msra.mxu0 0
        %1815 = vmatprep.subr.bf16.mxu0 0
        %1816 = vmatpush1.bf16.msra.mxu0 0
        %1817 = vmatprep.mubr.bf16.mxu0 0
        %1818 = vmatmul.mubr.bf16.gmra.mrb[0].mxu0 %v1777
        %v1819 = vpop.f32.mrb[0].mxu0
        %v1820 = vadd.f32 0.0, %v1819
        %v1821 = vpop.f32.mrb[0].mxu0
        %v1822 = vadd.f32 0.0, %v1821
        %v1823 = vpop.f32.mrb[0].mxu0
        %v1824 = vpop.f32.mrb[0].mxu0
        %1825 = vdwg.mxu0
        %v1826 = vadd.f32 %v1747, %v1820
        %v1827 = vadd.f32 %v1748, %v1822
        %1828 = vst [vmem:[#allocation2] sm:$0xff] %v1826
        %1829 = vst [vmem:[#allocation2 + $0x8] sm:$0xff] %v1827
        %v1830 = vld [vmem:[#allocation4 + $0x2] sm:$0x3f]
        %v1831 = vld [vmem:[#allocation2] sm:$0xff]
        %v1832 = vld [vmem:[#allocation2 + $0x8] sm:$0xff]
        %s1833 = scalar_lea.vmem %s349, 28
        %v1834 = vld [vmem:[%s1833] sm:$0xf]
        %v1836 = vcombine.high %v1830, %v1830
        %v1838 = vunpack.c.l.s4 1983009808
        %v1839 = vunpack.c.0.s8 %v1838
        %v1840 = vlaneseq
        %v1841 = vshrl.u32 %v1840, 7
        %v1842 = vsub.s32 %v1839, %v1841
        %v1843 = vrot.slane %v1830, %v1842
        %v1845 = vunpack.c.l.s4 1983009808
        %v1846 = vunpack.c.0.s8 %v1845
        %v1847 = vlaneseq
        %v1848 = vshrl.u32 %v1847, 7
        %v1849 = vsub.s32 %v1846, %v1848
        %v1850 = vrot.slane %v1836, %v1849
        %v1851 = vcombine.high %v1843, %v1843
        %1852 = vrot.lane.b32.xlu0 %v1843, 112
        %v1853 = vpop.permute.xlu0 %1852
        %1854 = vrot.lane.b32.xlu0 %v1851, 112
        %v1855 = vpop.permute.xlu0 %1854
        %1856 = vrot.lane.b32.xlu0 %v1850, 112
        %v1857 = vpop.permute.xlu0 %1856
        %v1858 = vsel %vm1087, %v1853, %v1855
        %v1859 = vsel %vm1087, %v1855, %v1857
        %v1861 = vsel %vm462, %v1834, 0
        %v1864 = vsel %vm466, %v1858, 0
        %v1867 = vsel %vm466, %v1859, 0
        %1869 = vmatprep.subr.bf16.mxu0 %v1867
        %1870 = vmatpush1.bf16.msra.mxu0 %v1864
        %1871 = vmatprep.subr.bf16.mxu0 0
        %1872 = vmatpush1.bf16.msra.mxu0 0
        %1873 = vmatprep.subr.bf16.mxu0 0
        %1874 = vmatpush1.bf16.msra.mxu0 0
        %1875 = vmatprep.subr.bf16.mxu0 0
        %1876 = vmatpush1.bf16.msra.mxu0 0
        %1877 = vmatprep.subr.bf16.mxu0 0
        %1878 = vmatpush1.bf16.msra.mxu0 0
        %1879 = vmatprep.subr.bf16.mxu0 0
        %1880 = vmatpush1.bf16.msra.mxu0 0
        %1881 = vmatprep.subr.bf16.mxu0 0
        %1882 = vmatpush1.bf16.msra.mxu0 0
        %1883 = vmatprep.subr.bf16.mxu0 0
        %1884 = vmatpush1.bf16.msra.mxu0 0
        %1885 = vmatprep.subr.bf16.mxu0 0
        %1886 = vmatpush1.bf16.msra.mxu0 0
        %1887 = vmatprep.subr.bf16.mxu0 0
        %1888 = vmatpush1.bf16.msra.mxu0 0
        %1889 = vmatprep.subr.bf16.mxu0 0
        %1890 = vmatpush1.bf16.msra.mxu0 0
        %1891 = vmatprep.subr.bf16.mxu0 0
        %1892 = vmatpush1.bf16.msra.mxu0 0
        %1893 = vmatprep.subr.bf16.mxu0 0
        %1894 = vmatpush1.bf16.msra.mxu0 0
        %1895 = vmatprep.subr.bf16.mxu0 0
        %1896 = vmatpush1.bf16.msra.mxu0 0
        %1897 = vmatprep.subr.bf16.mxu0 0
        %1898 = vmatpush1.bf16.msra.mxu0 0
        %1899 = vmatprep.subr.bf16.mxu0 0
        %1900 = vmatpush1.bf16.msra.mxu0 0
        %1901 = vmatprep.mubr.bf16.mxu0 0
        %1902 = vmatmul.mubr.bf16.gmra.mrb[0].mxu0 %v1861
        %v1903 = vpop.f32.mrb[0].mxu0
        %v1904 = vadd.f32 0.0, %v1903
        %v1905 = vpop.f32.mrb[0].mxu0
        %v1906 = vadd.f32 0.0, %v1905
        %v1907 = vpop.f32.mrb[0].mxu0
        %v1908 = vpop.f32.mrb[0].mxu0
        %1909 = vdwg.mxu0
        %v1910 = vadd.f32 %v1831, %v1904
        %v1911 = vadd.f32 %v1832, %v1906
        %1912 = vst [vmem:[#allocation2] sm:$0xff] %v1910
        %1913 = vst [vmem:[#allocation2 + $0x8] sm:$0xff] %v1911
        %v1914 = vld [vmem:[#allocation4 + $0x2] sm:$0x3f]
        %v1915 = vmul.bf16 %v1914, %v1148
        %v1916 = vld [vmem:[#allocation2] sm:$0xff]
        %v1917 = vld [vmem:[#allocation2 + $0x8] sm:$0xff]
        %s1918 = scalar_lea.vmem %s349, 32
        %v1919 = vld [vmem:[%s1918] sm:$0xf]
        %v1921 = vcombine.high %v1915, %v1915
        %v1923 = vunpack.c.l.s4 1983009808
        %v1924 = vunpack.c.0.s8 %v1923
        %v1925 = vlaneseq
        %v1926 = vshrl.u32 %v1925, 7
        %v1927 = vsub.s32 %v1924, %v1926
        %v1928 = vrot.slane %v1915, %v1927
        %v1930 = vunpack.c.l.s4 1983009808
        %v1931 = vunpack.c.0.s8 %v1930
        %v1932 = vlaneseq
        %v1933 = vshrl.u32 %v1932, 7
        %v1934 = vsub.s32 %v1931, %v1933
        %v1935 = vrot.slane %v1921, %v1934
        %v1936 = vcombine.high %v1928, %v1928
        %1937 = vrot.lane.b32.xlu0 %v1928, 111
        %v1938 = vpop.permute.xlu0 %1937
        %1939 = vrot.lane.b32.xlu0 %v1936, 111
        %v1940 = vpop.permute.xlu0 %1939
        %1941 = vrot.lane.b32.xlu0 %v1935, 111
        %v1942 = vpop.permute.xlu0 %1941
        %v1943 = vsel %vm429, %v1938, %v1940
        %v1944 = vsel %vm429, %v1940, %v1942
        %v1946 = vsel %vm462, %v1919, 0
        %v1949 = vsel %vm466, %v1943, 0
        %v1952 = vsel %vm466, %v1944, 0
        %1954 = vmatprep.subr.bf16.mxu0 %v1952
        %1955 = vmatpush1.bf16.msra.mxu0 %v1949
        %1956 = vmatprep.subr.bf16.mxu0 0
        %1957 = vmatpush1.bf16.msra.mxu0 0
        %1958 = vmatprep.subr.bf16.mxu0 0
        %1959 = vmatpush1.bf16.msra.mxu0 0
        %1960 = vmatprep.subr.bf16.mxu0 0
        %1961 = vmatpush1.bf16.msra.mxu0 0
        %1962 = vmatprep.subr.bf16.mxu0 0
        %1963 = vmatpush1.bf16.msra.mxu0 0
        %1964 = vmatprep.subr.bf16.mxu0 0
        %1965 = vmatpush1.bf16.msra.mxu0 0
        %1966 = vmatprep.subr.bf16.mxu0 0
        %1967 = vmatpush1.bf16.msra.mxu0 0
        %1968 = vmatprep.subr.bf16.mxu0 0
        %1969 = vmatpush1.bf16.msra.mxu0 0
        %1970 = vmatprep.subr.bf16.mxu0 0
        %1971 = vmatpush1.bf16.msra.mxu0 0
        %1972 = vmatprep.subr.bf16.mxu0 0
        %1973 = vmatpush1.bf16.msra.mxu0 0
        %1974 = vmatprep.subr.bf16.mxu0 0
        %1975 = vmatpush1.bf16.msra.mxu0 0
        %1976 = vmatprep.subr.bf16.mxu0 0
        %1977 = vmatpush1.bf16.msra.mxu0 0
        %1978 = vmatprep.subr.bf16.mxu0 0
        %1979 = vmatpush1.bf16.msra.mxu0 0
        %1980 = vmatprep.subr.bf16.mxu0 0
        %1981 = vmatpush1.bf16.msra.mxu0 0
        %1982 = vmatprep.subr.bf16.mxu0 0
        %1983 = vmatpush1.bf16.msra.mxu0 0
        %1984 = vmatprep.subr.bf16.mxu0 0
        %1985 = vmatpush1.bf16.msra.mxu0 0
        %1986 = vmatprep.mubr.bf16.mxu0 0
        %1987 = vmatmul.mubr.bf16.gmra.mrb[0].mxu0 %v1946
        %v1988 = vpop.f32.mrb[0].mxu0
        %v1989 = vadd.f32 0.0, %v1988
        %v1990 = vpop.f32.mrb[0].mxu0
        %v1991 = vadd.f32 0.0, %v1990
        %v1992 = vpop.f32.mrb[0].mxu0
        %v1993 = vpop.f32.mrb[0].mxu0
        %1994 = vdwg.mxu0
        %v1995 = vadd.f32 %v1916, %v1989
        %v1996 = vadd.f32 %v1917, %v1991
        %1997 = vst [vmem:[#allocation2] sm:$0xff] %v1995
        %1998 = vst [vmem:[#allocation2 + $0x8] sm:$0xff] %v1996
        // Predicated region
        $region49: #{tpu_custom_call.1} parent=43 // pred_check
          %p1999 = pneg %p351
        $region50: #{tpu_custom_call.1} parent=43 // pred_check_branch
          %2001 = sbr.rel (%p1999) target = $region52
        $region51: #{tpu_custom_call.1} parent=43 // pred_region
          %v2002 = vld [vmem:[#allocation2] sm:$0xff]
          %v2003 = vld [vmem:[#allocation2 + $0x8] sm:$0xff]
          %v2004 = vld [vmem:[%s4] sm:$0xff]
          %2006 = vset.pattern.permute.xlu0 0
          %2007 = vperm.xlu0 %2006, %v2004
          %v2008 = vpop.permute.xlu0 %2007
          %v2010 = vadd.f32 %v2002, %v2008
          %v2011 = vadd.f32 %v2003, %v2008
          %v2012 = vmax.f32 %v2010, 0.0
          %v2013 = vmax.f32 %v2011, 0.0
          %2014 = vst [vmem:[%s321] sm:$0xff] %v2012
          %2015 = vst [vmem:[%s321 + $0x8] sm:$0xff] %v2013
        $region52: #{tpu_custom_call.1} parent=43 // pred_fallthru
          _
        %s2016 = sand.u32 %s190, 1
        %s2017 = scalar_lea.sflag [#allocation6], %s2016
        %s2018 = sand.u32 %s190, 1
        %s2019 = smul.addr %s2018, 16
        %s2020 = scalar_lea.vmem [#allocation5], %s2019
        // Predicated region
        $region53: #{tpu_custom_call.1} parent=43 // pred_check
          %p2021 = pneg %p200
        $region54: #{tpu_custom_call.1} parent=43 // pred_check_branch
          %2023 = sbr.rel (%p2021) target = $region56
        $region55: #{tpu_custom_call.1} parent=43 // pred_region
          %s2025 = ssub.s32 256, 256
          %2026 = vsyncadd %s2017, %s2025
          %s2027 = smul.addr %s24, 2
          %s2028 = smul.addr %s2027, 128
          %s2029 = scalar_lea.hbm %s6, %s2028
          %s2031 = sshll.u32 %s2020, 4
          %s2032 = int_to_ptr.vmem [resolvable:$true] %s2031
          %2034 = dma.vmem_to_hbm [thread:$0]  %s2032, 256, %s2029, %s2017
        $region56: #{tpu_custom_call.1} parent=43 // pred_fallthru
          _
      $region44: #{tpu_custom_call.1} parent=5 // pred_fallthru
        _
      %p2035 = scmp.le.s32.totalorder 2, %s15
      // Predicated region
      $region57: #{tpu_custom_call.1} parent=5 // pred_check
        %p2036 = pneg %p2035
      $region58: #{tpu_custom_call.1} parent=5 // pred_check_branch
        %2038 = sbr.rel (%p2036) target = $region60
      $region59: #{tpu_custom_call.1} parent=5 // pred_region
        %s2039 = ssub.s32 %s15, 2
        // Predicated region
        $region61: #{tpu_custom_call.1} parent=59 // pred_check
          %p2040 = pneg %p206
        $region62: #{tpu_custom_call.1} parent=59 // pred_check_branch
          %2042 = sbr.rel (%p2040) target = $region64
        $region63: #{tpu_custom_call.1} parent=59 // pred_region
          %s2043 = sand.u32 %s191, 1
          %s2044 = scalar_lea.sflag [#allocation6], %s2043
          %s2045 = sand.u32 %s191, 1
          %s2046 = smul.addr %s2045, 16
          %s2047 = scalar_lea.vmem [#allocation5], %s2046
          %2048 = dma.done %s2044, 256
        $region64: #{tpu_custom_call.1} parent=59 // pred_fallthru
          _
      $region60: #{tpu_custom_call.1} parent=5 // pred_fallthru
        _
    $region6: #{tpu_custom_call.1} parent=1 // loop_footer
      %s19 = sadd.s32 1, %s15
    $region7: #{tpu_custom_call.1} parent=1 // loop_footer_branch
      %14 = sbr.rel target = $region3
    $region8: #{tpu_custom_call.1} parent=1 // loop_exit
      _
    %2049 = vsyncpa [#allocation6], 1
    %s2050 = scalar_lea.sflag [#allocation6], 1
    %2051 = vsyncpa %s2050, 1

</llo_original>
